<compile_context>
chip_gen: v7x
topology: tpu7x:2x2x1
jax: 0.10.0
libtpu: 0.0.40
codegen_flags: <defaults>
</compile_context>

<pallas_src>
import math
from functools import partial

import jax
import jax.numpy as jnp
import numpy as np
from jax.experimental import pallas as pl
from jax.experimental.pallas import tpu as pltpu


# ---------------------------------------------------------------------------
# Small in-kernel layout helpers (slices + concatenation only — no lane reshape).
# ---------------------------------------------------------------------------
def _split_heads(x, nhead, head_dim):
    """(L, nhead*head_dim) -> (nhead, L, head_dim) via static lane slices."""
    return jnp.stack(
        [x[:, h * head_dim:(h + 1) * head_dim] for h in range(nhead)], axis=0)


def _merge_heads(x, nhead):
    """(nhead, L, head_dim) -> (L, nhead*head_dim) (head-major concat)."""
    return jnp.concatenate([x[h] for h in range(nhead)], axis=-1)


# ---------------------------------------------------------------------------
# Pallas kernel.  Grid = (B, Lq/tq, Lk/tk); the last axis streams K/V tiles with
# an online softmax.  Everything (QKV projection, QK^T, softmax, PV, output
# projection, residual, LayerNorm) happens in-kernel.
# ---------------------------------------------------------------------------
def _cross_attn_kernel(*refs, nhead, head_dim, eps, has_qpos, has_pos):
    it = iter(refs)
    tgt_ref = next(it)
    qpos_ref = next(it) if has_qpos else None
    mem_ref = next(it)
    pos_ref = next(it) if has_pos else None
    (wq_ref, wk_ref, wv_ref, bq_ref, bk_ref, bv_ref,
     wo_ref, bo_ref, g_ref, beta_ref,
     out_ref, q_sc, m_sc, l_sc, acc_sc) = it

    f32 = jnp.float32
    cdt = jnp.bfloat16                         # MXU datapath dtype
    ki = pl.program_id(2)
    tq, D = tgt_ref.shape[1], tgt_ref.shape[2]
    tk = mem_ref.shape[1]

    # --- once per (batch, q-tile): Q projection (merged (tq,D)@(D,D)) + state init ---
    @pl.when(ki == 0)
    def _():
        t = tgt_ref[0]
        q_in = (t + qpos_ref[0]) if has_qpos else t
        q = jnp.dot(q_in.astype(cdt), wq_ref[...],          # 1/sqrt(hd) folded in wq/bq
                    preferred_element_type=f32) + bq_ref[...]
        q_sc[...] = _split_heads(q.astype(cdt), nhead, head_dim)     # (nhead, tq, hd) bf16
        m_sc[...] = jnp.full_like(m_sc, -jnp.inf)
        l_sc[...] = jnp.zeros_like(l_sc)
        acc_sc[...] = jnp.zeros_like(acc_sc)

    # --- every step: K/V projections for this memory tile (merged, lane-dense) ---
    mem = mem_ref[0]
    k_in = (mem + pos_ref[0]) if has_pos else mem
    k = jnp.dot(k_in.astype(cdt), wk_ref[...], preferred_element_type=f32) + bk_ref[...]
    v = jnp.dot(mem.astype(cdt), wv_ref[...], preferred_element_type=f32) + bv_ref[...]
    kh = _split_heads(k.astype(cdt), nhead, head_dim)        # (nhead, tk, hd) bf16
    vh = _split_heads(v.astype(cdt), nhead, head_dim)        # (nhead, tk, hd) bf16

    # --- online softmax update (flash style; stats & accumulator stay f32) ---
    s = jnp.einsum('hqd,hkd->hqk', q_sc[...], kh,
                   preferred_element_type=f32)                # (nhead, tq, tk)
    m_prev = m_sc[...]
    m_new = jnp.maximum(m_prev, jnp.max(s, axis=-1, keepdims=True))
    alpha = jnp.exp(m_prev - m_new)
    p = jnp.exp(s - m_new)
    l_sc[...] = alpha * l_sc[...] + jnp.sum(p, axis=-1, keepdims=True)
    acc_sc[...] = alpha * acc_sc[...] + jnp.einsum(
        'hqk,hkd->hqd', p.astype(cdt), vh, preferred_element_type=f32)
    m_sc[...] = m_new

    # --- finalize: normalize, merged output projection, residual, LayerNorm ---
    @pl.when(ki == pl.num_programs(2) - 1)
    def _():
        o = acc_sc[...] / l_sc[...]                           # exact divide, once per row
        o2 = _merge_heads(o.astype(cdt), nhead)               # (tq, D) head-major concat
        attn = jnp.dot(o2, wo_ref[...], preferred_element_type=f32) + bo_ref[...]
        x = tgt_ref[0].astype(f32) + attn
        mu = jnp.mean(x, axis=-1, keepdims=True)
        xc = x - mu
        var = jnp.mean(xc * xc, axis=-1, keepdims=True)
        y = xc * jax.lax.rsqrt(var + eps)
        out_ref[0] = (y * g_ref[...] + beta_ref[...]).astype(out_ref.dtype)


# ---------------------------------------------------------------------------
# One-time parameter prep: merged (D, D) weights (bf16) with the q scale folded in.
# ---------------------------------------------------------------------------
def prepare_params(in_proj_weight, in_proj_bias, out_proj_weight, out_proj_bias,
                   ln_weight, ln_bias, *, d_model, nhead,
                   compute_dtype=jnp.bfloat16):
    hd = d_model // nhead
    scale = 1.0 / math.sqrt(hd)
    wq, wk, wv = jnp.split(in_proj_weight, 3, axis=0)   # (D, D), rows = out features
    bq, bk, bv = jnp.split(in_proj_bias, 3, axis=0)     # (D,)
    return dict(
        wq=(wq.T * scale).astype(compute_dtype),         # (D_in, D_out), scale folded
        wk=wk.T.astype(compute_dtype),
        wv=wv.T.astype(compute_dtype),
        bq=(bq * scale).reshape(1, d_model).astype(jnp.float32),
        bk=bk.reshape(1, d_model).astype(jnp.float32),
        bv=bv.reshape(1, d_model).astype(jnp.float32),
        wo=out_proj_weight.T.astype(compute_dtype),       # (D, D)
        bo=out_proj_bias.reshape(1, d_model).astype(jnp.float32),
        ln_g=ln_weight.reshape(1, d_model).astype(jnp.float32),
        ln_b=ln_bias.reshape(1, d_model).astype(jnp.float32),
    )


def _pick_tile(length, target):
    """Largest multiple-of-8 divisor of `length` that is <= target (or full length)."""
    if length <= target:
        return length
    for t in range(target - target % 8, 7, -8):
        if length % t == 0:
            return t
    return length    # fall back to untiled; TODO(synk): pad + mask ragged Lk/Lq


# ---------------------------------------------------------------------------
# Wrapper: layout glue + pallas_call.
# ---------------------------------------------------------------------------
def cross_attention_layer(tgt, memory, params, *, nhead, pos=None, query_pos=None,
                          tq_target=256, tk_target=512, eps=1e-5):
    """tgt: (Lq, B, D), memory: (Lk, B, D) — PyTorch seq-first convention."""
    Lq, B, D = tgt.shape
    Lk = memory.shape[0]
    hd = D // nhead
    has_qpos = query_pos is not None
    has_pos = pos is not None

    tq = _pick_tile(Lq, tq_target)
    tk = _pick_tile(Lk, tk_target)

    # batch-first (B, L, D): each block's trailing dims are either full or 8-aligned.
    tgt_b = jnp.transpose(tgt, (1, 0, 2))
    mem_b = jnp.transpose(memory, (1, 0, 2))

    q_spec = pl.BlockSpec((1, tq, D), lambda b, qi, ki: (b, qi, 0))
    k_spec = pl.BlockSpec((1, tk, D), lambda b, qi, ki: (b, ki, 0))
    w_dd = pl.BlockSpec((D, D), lambda b, qi, ki: (0, 0))    # constant -> fetched once
    vec_d = pl.BlockSpec((1, D), lambda b, qi, ki: (0, 0))

    inputs, in_specs = [tgt_b], [q_spec]
    if has_qpos:
        inputs.append(jnp.transpose(query_pos, (1, 0, 2)))
        in_specs.append(q_spec)
    inputs.append(mem_b)
    in_specs.append(k_spec)
    if has_pos:
        inputs.append(jnp.transpose(pos, (1, 0, 2)))
        in_specs.append(k_spec)
    inputs += [params["wq"], params["wk"], params["wv"],
               params["bq"], params["bk"], params["bv"],
               params["wo"], params["bo"], params["ln_g"], params["ln_b"]]
    in_specs += [w_dd, w_dd, w_dd, vec_d, vec_d, vec_d, w_dd, vec_d, vec_d, vec_d]

    scratch_shapes = [
        pltpu.VMEM((nhead, tq, hd), jnp.bfloat16),   # Q, head-major (reused over ki)
        pltpu.VMEM((nhead, tq, 1), jnp.float32),     # running max
        pltpu.VMEM((nhead, tq, 1), jnp.float32),     # running denominator
        pltpu.VMEM((nhead, tq, hd), jnp.float32),    # PV accumulator
    ]

    # VMEM budget: double-buffered activation tiles + weights + scratch + scores,
    # clamped so it always fits v7x's 64 MiB physical VMEM.
    bpe = jnp.dtype(tgt.dtype).itemsize
    wpe = jnp.dtype(params["wq"].dtype).itemsize
    est = (2 * (2 if has_qpos else 1) * tq * D * bpe
           + 2 * (2 if has_pos else 1) * tk * D * bpe
           + 2 * tq * D * bpe
           + 2 * 4 * D * D * wpe + 2 * 7 * D * 4
           + nhead * tq * (6 * hd + 8)
           + 2 * nhead * tq * tk * 4)
    vmem_limit = int(min(max(2 * est, 32 * 1024 * 1024), 48 * 1024 * 1024))

    kernel = partial(_cross_attn_kernel, nhead=nhead, head_dim=hd, eps=eps,
                     has_qpos=has_qpos, has_pos=has_pos)

    out_b = pl.pallas_call(
        kernel,
        out_shape=jax.ShapeDtypeStruct((B, Lq, D), tgt.dtype),
        grid_spec=pltpu.PrefetchScalarGridSpec(
            num_scalar_prefetch=0,
            grid=(B, Lq // tq, Lk // tk),
            in_specs=in_specs,
            out_specs=pl.BlockSpec((1, tq, D), lambda b, qi, ki: (b, qi, 0)),
            scratch_shapes=scratch_shapes,
        ),
        compiler_params=pltpu.CompilerParams(
            dimension_semantics=("parallel", "parallel", "arbitrary"),
            vmem_limit_bytes=vmem_limit),
    )(*inputs)

    return jnp.transpose(out_b, (1, 0, 2))   # back to (Lq, B, D)


# ---------------------------------------------------------------------------
# Pure-JAX f32 reference from the RAW PyTorch-layout weights (independent check
# of both the kernel and the parameter prep).
# ---------------------------------------------------------------------------
def reference(tgt, memory, in_proj_w, in_proj_b, out_w, out_b, ln_g, ln_b,
              *, nhead, pos=None, query_pos=None):
    Lq, B, D = tgt.shape
    hd = D // nhead
    q_in = tgt if query_pos is None else tgt + query_pos
    k_in = memory if pos is None else memory + pos
    wq, wk, wv = jnp.split(in_proj_w, 3, axis=0)
    bq, bk, bv = jnp.split(in_proj_b, 3, axis=0)
    q = jnp.einsum('lbd,jd->lbj', q_in, wq) + bq
    k = jnp.einsum('lbd,jd->lbj', k_in, wk) + bk
    v = jnp.einsum('lbd,jd->lbj', memory, wv) + bv

    def split(x):
        L = x.shape[0]
        return x.reshape(L, B, nhead, hd).transpose(1, 2, 0, 3)   # (B, h, L, hd)

    qh = split(q) / math.sqrt(hd)
    kh, vh = split(k), split(v)
    s = jnp.einsum('bhqd,bhkd->bhqk', qh, kh)
    p = jax.nn.softmax(s, axis=-1)
    o = jnp.einsum('bhqk,bhkd->bhqd', p, vh)
    o = o.transpose(2, 0, 1, 3).reshape(Lq, B, D)                 # head-major concat
    attn = jnp.einsum('lbd,jd->lbj', o, out_w) + out_b
    x = tgt + attn
    mu = x.mean(-1, keepdims=True)
    var = ((x - mu) ** 2).mean(-1, keepdims=True)
    return (x - mu) / jnp.sqrt(var + 1e-5) * ln_g + ln_b


def _xavier(key, shape, fan_in, fan_out, dtype=jnp.float32):
    bound = math.sqrt(6.0 / (fan_in + fan_out))
    return jax.random.uniform(key, shape, dtype, minval=-bound, maxval=bound)


if __name__ == "__main__":
    d_model, nhead = 32, 4
    Lq, Lk, B = 16, 32, 2

    key = jax.random.PRNGKey(0)
    k_inproj, k_out, k_tgt, k_mem, k_qpos, k_pos = jax.random.split(key, 6)

    # Module parameters in raw PyTorch layout (xavier-uniform for >1-dim params,
    # zero biases, LayerNorm gamma=1 / beta=0, like the module's _reset_parameters).
    in_proj_w = _xavier(k_inproj, (3 * d_model, d_model), d_model, 3 * d_model)
    in_proj_b = jnp.zeros((3 * d_model,), jnp.float32)
    out_w = _xavier(k_out, (d_model, d_model), d_model, d_model)
    out_b = jnp.zeros((d_model,), jnp.float32)
    ln_g = jnp.ones((d_model,), jnp.float32)
    ln_b = jnp.zeros((d_model,), jnp.float32)

    params = prepare_params(in_proj_w, in_proj_b, out_w, out_b, ln_g, ln_b,
                            d_model=d_model, nhead=nhead)

    # Inputs: seq-first (L, B, D), like PyTorch nn.MultiheadAttention default.
    tgt = jax.random.normal(k_tgt, (Lq, B, d_model), jnp.float32)
    memory = jax.random.normal(k_mem, (Lk, B, d_model), jnp.float32)
    query_pos = jax.random.normal(k_qpos, (Lq, B, d_model), jnp.float32)
    pos = jax.random.normal(k_pos, (Lk, B, d_model), jnp.float32)

    # bf16 MXU datapath vs. pure-f32 reference -> tolerance a few %.
    TOL = dict(rtol=5e-2, atol=5e-2)

    # 1) With positional embeddings; small tiles so the Lk-tiled online softmax and
    #    the parallel Lq-tile axis are actually exercised (grid = (2, 2, 2)).
    out = cross_attention_layer(tgt, memory, params, nhead=nhead,
                                pos=pos, query_pos=query_pos,
                                tq_target=8, tk_target=16)
    out = jax.block_until_ready(out)
    ref = reference(tgt, memory, in_proj_w, in_proj_b, out_w, out_b, ln_g, ln_b,
                    nhead=nhead, pos=pos, query_pos=query_pos)
    np.testing.assert_allclose(np.asarray(out), np.asarray(ref), **TOL)

    # 2) Without positional embeddings (no zero tensors are streamed), default tiles.
    out2 = cross_attention_layer(tgt, memory, params, nhead=nhead)
    out2 = jax.block_until_ready(out2)
    ref2 = reference(tgt, memory, in_proj_w, in_proj_b, out_w, out_b, ln_g, ln_b,
                     nhead=nhead, pos=None, query_pos=None)
    np.testing.assert_allclose(np.asarray(out2), np.asarray(ref2), **TOL)

    print("KERNEL_OK")
</pallas_src>

<mosaic_0001>
module attributes {stable_mosaic.version = 11 : i64} {
  func.func @_cross_attn_kernel(%arg0: i32, %arg1: i32, %arg2: i32, %arg3: memref<1x8x32xf32, #tpu.memory_space<vmem>>, %arg4: memref<1x8x32xf32, #tpu.memory_space<vmem>>, %arg5: memref<1x16x32xf32, #tpu.memory_space<vmem>>, %arg6: memref<1x16x32xf32, #tpu.memory_space<vmem>>, %arg7: memref<32x32xbf16, #tpu.memory_space<vmem>>, %arg8: memref<32x32xbf16, #tpu.memory_space<vmem>>, %arg9: memref<32x32xbf16, #tpu.memory_space<vmem>>, %arg10: memref<1x32xf32, #tpu.memory_space<vmem>>, %arg11: memref<1x32xf32, #tpu.memory_space<vmem>>, %arg12: memref<1x32xf32, #tpu.memory_space<vmem>>, %arg13: memref<32x32xbf16, #tpu.memory_space<vmem>>, %arg14: memref<1x32xf32, #tpu.memory_space<vmem>>, %arg15: memref<1x32xf32, #tpu.memory_space<vmem>>, %arg16: memref<1x32xf32, #tpu.memory_space<vmem>>, %arg17: memref<1x8x32xf32, #tpu.memory_space<vmem>>, %arg18: memref<4x8x8xbf16, #tpu.memory_space<vmem>>, %arg19: memref<4x8x1xf32, #tpu.memory_space<vmem>>, %arg20: memref<4x8x1xf32, #tpu.memory_space<vmem>>, %arg21: memref<4x8x8xf32, #tpu.memory_space<vmem>>) attributes {dimension_semantics = [#tpu.dimension_semantics<parallel>, #tpu.dimension_semantics<parallel>, #tpu.dimension_semantics<arbitrary>], iteration_bounds = array<i64: 2, 2, 2>, scalar_prefetch = 0 : i64, scratch_operands = 4 : i64, tpu.core_type = #tpu.core_type<tc>, window_params = [{transform_indices = @transform_0, window_bounds = array<i64: 1, 8, 32>}, {transform_indices = @transform_1, window_bounds = array<i64: 1, 8, 32>}, {transform_indices = @transform_2, window_bounds = array<i64: 1, 16, 32>}, {transform_indices = @transform_3, window_bounds = array<i64: 1, 16, 32>}, {pipeline_mode = #tpu.pipeline_mode<synchronous>, transform_indices = @transform_4, window_bounds = array<i64: 32, 32>}, {pipeline_mode = #tpu.pipeline_mode<synchronous>, transform_indices = @transform_5, window_bounds = array<i64: 32, 32>}, {pipeline_mode = #tpu.pipeline_mode<synchronous>, transform_indices = @transform_6, window_bounds = array<i64: 32, 32>}, {pipeline_mode = #tpu.pipeline_mode<synchronous>, transform_indices = @transform_7, window_bounds = array<i64: 1, 32>}, {pipeline_mode = #tpu.pipeline_mode<synchronous>, transform_indices = @transform_8, window_bounds = array<i64: 1, 32>}, {pipeline_mode = #tpu.pipeline_mode<synchronous>, transform_indices = @transform_9, window_bounds = array<i64: 1, 32>}, {pipeline_mode = #tpu.pipeline_mode<synchronous>, transform_indices = @transform_10, window_bounds = array<i64: 32, 32>}, {pipeline_mode = #tpu.pipeline_mode<synchronous>, transform_indices = @transform_11, window_bounds = array<i64: 1, 32>}, {pipeline_mode = #tpu.pipeline_mode<synchronous>, transform_indices = @transform_12, window_bounds = array<i64: 1, 32>}, {pipeline_mode = #tpu.pipeline_mode<synchronous>, transform_indices = @transform_13, window_bounds = array<i64: 1, 32>}, {transform_indices = @transform_14, window_bounds = array<i64: 1, 8, 32>}]} {
    %c0_i32 = arith.constant 0 : i32
    %0 = arith.cmpi eq, %arg2, %c0_i32 : i32
    %1 = arith.extui %0 : i1 to i32
    %c0_i32_0 = arith.constant 0 : i32
    %2 = arith.cmpi ne, %1, %c0_i32_0 : i32
    scf.if %2 {
      %c0_41 = arith.constant 0 : index
      %c0_42 = arith.constant 0 : index
      %c0_43 = arith.constant 0 : index
      %68 = vector.load %arg3[%c0_41, %c0_42, %c0_43] : memref<1x8x32xf32, #tpu.memory_space<vmem>>, vector<1x8x32xf32>
      %69 = vector.shape_cast %68 : vector<1x8x32xf32> to vector<8x32xf32>
      %c0_44 = arith.constant 0 : index
      %c0_45 = arith.constant 0 : index
      %c0_46 = arith.constant 0 : index
      %70 = vector.load %arg4[%c0_44, %c0_45, %c0_46] : memref<1x8x32xf32, #tpu.memory_space<vmem>>, vector<1x8x32xf32>
      %71 = vector.shape_cast %70 : vector<1x8x32xf32> to vector<8x32xf32>
      %72 = arith.addf %69, %71 : vector<8x32xf32>
      %73 = arith.truncf %72 : vector<8x32xf32> to vector<8x32xbf16>
      %c0_47 = arith.constant 0 : index
      %c0_48 = arith.constant 0 : index
      %74 = vector.load %arg7[%c0_47, %c0_48] : memref<32x32xbf16, #tpu.memory_space<vmem>>, vector<32x32xbf16>
      %cst_49 = arith.constant dense<0.000000e+00> : vector<8x32xf32>
      %75 = tpu.matmul %73, %74, %cst_49 {dimension_numbers = #tpu.dot_dimension_numbers<[1], [0], [0], [1], [0, 0, 1, 1], [], []>} : vector<8x32xbf16>, vector<32x32xbf16>, vector<8x32xf32> -> vector<8x32xf32>
      %c0_50 = arith.constant 0 : index
      %c0_51 = arith.constant 0 : index
      %76 = vector.load %arg10[%c0_50, %c0_51] : memref<1x32xf32, #tpu.memory_space<vmem>>, vector<1x32xf32>
      %77 = vector.broadcast %76 : vector<1x32xf32> to vector<8x32xf32>
      %78 = arith.addf %75, %77 : vector<8x32xf32>
      %79 = arith.truncf %78 : vector<8x32xf32> to vector<8x32xbf16>
      %80 = vector.extract_strided_slice %79 {offsets = [0, 0], sizes = [8, 8], strides = [1, 1]} : vector<8x32xbf16> to vector<8x8xbf16>
      %81 = vector.extract_strided_slice %79 {offsets = [0, 8], sizes = [8, 8], strides = [1, 1]} : vector<8x32xbf16> to vector<8x8xbf16>
      %82 = vector.extract_strided_slice %79 {offsets = [0, 16], sizes = [8, 8], strides = [1, 1]} : vector<8x32xbf16> to vector<8x8xbf16>
      %83 = vector.extract_strided_slice %79 {offsets = [0, 24], sizes = [8, 8], strides = [1, 1]} : vector<8x32xbf16> to vector<8x8xbf16>
      %84 = vector.shape_cast %80 : vector<8x8xbf16> to vector<1x8x8xbf16>
      %85 = vector.shape_cast %81 : vector<8x8xbf16> to vector<1x8x8xbf16>
      %86 = vector.shape_cast %82 : vector<8x8xbf16> to vector<1x8x8xbf16>
      %87 = vector.shape_cast %83 : vector<8x8xbf16> to vector<1x8x8xbf16>
      %88 = tpu.concatenate %84, %85, %86, %87 in 0 : vector<1x8x8xbf16>, vector<1x8x8xbf16>, vector<1x8x8xbf16>, vector<1x8x8xbf16> -> vector<4x8x8xbf16>
      %c0_52 = arith.constant 0 : index
      %c0_53 = arith.constant 0 : index
      %c0_54 = arith.constant 0 : index
      %89 = vector.load %arg18[%c0_52, %c0_53, %c0_54] : memref<4x8x8xbf16, #tpu.memory_space<vmem>>, vector<4x8x8xbf16>
      tpu.vector_store %arg18[%c0_52, %c0_53, %c0_54], %88 {strides = array<i32>} : memref<4x8x8xbf16, #tpu.memory_space<vmem>>, vector<4x8x8xbf16>,
      %cst_55 = arith.constant 0xFF800000 : f32
      %90 = vector.broadcast %cst_55 : f32 to vector<4x8x1xf32>
      %c0_56 = arith.constant 0 : index
      %c0_57 = arith.constant 0 : index
      %c0_58 = arith.constant 0 : index
      %91 = vector.load %arg19[%c0_56, %c0_57, %c0_58] : memref<4x8x1xf32, #tpu.memory_space<vmem>>, vector<4x8x1xf32>
      tpu.vector_store %arg19[%c0_56, %c0_57, %c0_58], %90 {strides = array<i32>} : memref<4x8x1xf32, #tpu.memory_space<vmem>>, vector<4x8x1xf32>,
      %cst_59 = arith.constant 0.000000e+00 : f32
      %92 = vector.broadcast %cst_59 : f32 to vector<4x8x1xf32>
      %c0_60 = arith.constant 0 : index
      %c0_61 = arith.constant 0 : index
      %c0_62 = arith.constant 0 : index
      %93 = vector.load %arg20[%c0_60, %c0_61, %c0_62] : memref<4x8x1xf32, #tpu.memory_space<vmem>>, vector<4x8x1xf32>
      tpu.vector_store %arg20[%c0_60, %c0_61, %c0_62], %92 {strides = array<i32>} : memref<4x8x1xf32, #tpu.memory_space<vmem>>, vector<4x8x1xf32>,
      %cst_63 = arith.constant 0.000000e+00 : f32
      %94 = vector.broadcast %cst_63 : f32 to vector<4x8x8xf32>
      %c0_64 = arith.constant 0 : index
      %c0_65 = arith.constant 0 : index
      %c0_66 = arith.constant 0 : index
      %95 = vector.load %arg21[%c0_64, %c0_65, %c0_66] : memref<4x8x8xf32, #tpu.memory_space<vmem>>, vector<4x8x8xf32>
      tpu.vector_store %arg21[%c0_64, %c0_65, %c0_66], %94 {strides = array<i32>} : memref<4x8x8xf32, #tpu.memory_space<vmem>>, vector<4x8x8xf32>,
    } else {
    }
    %c0 = arith.constant 0 : index
    %c0_1 = arith.constant 0 : index
    %c0_2 = arith.constant 0 : index
    %3 = vector.load %arg5[%c0, %c0_1, %c0_2] : memref<1x16x32xf32, #tpu.memory_space<vmem>>, vector<1x16x32xf32>
    %4 = vector.shape_cast %3 : vector<1x16x32xf32> to vector<16x32xf32>
    %c0_3 = arith.constant 0 : index
    %c0_4 = arith.constant 0 : index
    %c0_5 = arith.constant 0 : index
    %5 = vector.load %arg6[%c0_3, %c0_4, %c0_5] : memref<1x16x32xf32, #tpu.memory_space<vmem>>, vector<1x16x32xf32>
    %6 = vector.shape_cast %5 : vector<1x16x32xf32> to vector<16x32xf32>
    %7 = arith.addf %4, %6 : vector<16x32xf32>
    %8 = arith.truncf %7 : vector<16x32xf32> to vector<16x32xbf16>
    %c0_6 = arith.constant 0 : index
    %c0_7 = arith.constant 0 : index
    %9 = vector.load %arg8[%c0_6, %c0_7] : memref<32x32xbf16, #tpu.memory_space<vmem>>, vector<32x32xbf16>
    %cst = arith.constant dense<0.000000e+00> : vector<16x32xf32>
    %10 = tpu.matmul %8, %9, %cst {dimension_numbers = #tpu.dot_dimension_numbers<[1], [0], [0], [1], [0, 0, 1, 1], [], []>} : vector<16x32xbf16>, vector<32x32xbf16>, vector<16x32xf32> -> vector<16x32xf32>
    %c0_8 = arith.constant 0 : index
    %c0_9 = arith.constant 0 : index
    %11 = vector.load %arg11[%c0_8, %c0_9] : memref<1x32xf32, #tpu.memory_space<vmem>>, vector<1x32xf32>
    %12 = vector.broadcast %11 : vector<1x32xf32> to vector<16x32xf32>
    %13 = arith.addf %10, %12 : vector<16x32xf32>
    %14 = arith.truncf %4 : vector<16x32xf32> to vector<16x32xbf16>
    %c0_10 = arith.constant 0 : index
    %c0_11 = arith.constant 0 : index
    %15 = vector.load %arg9[%c0_10, %c0_11] : memref<32x32xbf16, #tpu.memory_space<vmem>>, vector<32x32xbf16>
    %cst_12 = arith.constant dense<0.000000e+00> : vector<16x32xf32>
    %16 = tpu.matmul %14, %15, %cst_12 {dimension_numbers = #tpu.dot_dimension_numbers<[1], [0], [0], [1], [0, 0, 1, 1], [], []>} : vector<16x32xbf16>, vector<32x32xbf16>, vector<16x32xf32> -> vector<16x32xf32>
    %c0_13 = arith.constant 0 : index
    %c0_14 = arith.constant 0 : index
    %17 = vector.load %arg12[%c0_13, %c0_14] : memref<1x32xf32, #tpu.memory_space<vmem>>, vector<1x32xf32>
    %18 = vector.broadcast %17 : vector<1x32xf32> to vector<16x32xf32>
    %19 = arith.addf %16, %18 : vector<16x32xf32>
    %20 = arith.truncf %13 : vector<16x32xf32> to vector<16x32xbf16>
    %21 = vector.extract_strided_slice %20 {offsets = [0, 0], sizes = [16, 8], strides = [1, 1]} : vector<16x32xbf16> to vector<16x8xbf16>
    %22 = vector.extract_strided_slice %20 {offsets = [0, 8], sizes = [16, 8], strides = [1, 1]} : vector<16x32xbf16> to vector<16x8xbf16>
    %23 = vector.extract_strided_slice %20 {offsets = [0, 16], sizes = [16, 8], strides = [1, 1]} : vector<16x32xbf16> to vector<16x8xbf16>
    %24 = vector.extract_strided_slice %20 {offsets = [0, 24], sizes = [16, 8], strides = [1, 1]} : vector<16x32xbf16> to vector<16x8xbf16>
    %25 = vector.shape_cast %21 : vector<16x8xbf16> to vector<1x16x8xbf16>
    %26 = vector.shape_cast %22 : vector<16x8xbf16> to vector<1x16x8xbf16>
    %27 = vector.shape_cast %23 : vector<16x8xbf16> to vector<1x16x8xbf16>
    %28 = vector.shape_cast %24 : vector<16x8xbf16> to vector<1x16x8xbf16>
    %29 = tpu.concatenate %25, %26, %27, %28 in 0 : vector<1x16x8xbf16>, vector<1x16x8xbf16>, vector<1x16x8xbf16>, vector<1x16x8xbf16> -> vector<4x16x8xbf16>
    %30 = arith.truncf %19 : vector<16x32xf32> to vector<16x32xbf16>
    %31 = vector.extract_strided_slice %30 {offsets = [0, 0], sizes = [16, 8], strides = [1, 1]} : vector<16x32xbf16> to vector<16x8xbf16>
    %32 = vector.extract_strided_slice %30 {offsets = [0, 8], sizes = [16, 8], strides = [1, 1]} : vector<16x32xbf16> to vector<16x8xbf16>
    %33 = vector.extract_strided_slice %30 {offsets = [0, 16], sizes = [16, 8], strides = [1, 1]} : vector<16x32xbf16> to vector<16x8xbf16>
    %34 = vector.extract_strided_slice %30 {offsets = [0, 24], sizes = [16, 8], strides = [1, 1]} : vector<16x32xbf16> to vector<16x8xbf16>
    %35 = vector.shape_cast %31 : vector<16x8xbf16> to vector<1x16x8xbf16>
    %36 = vector.shape_cast %32 : vector<16x8xbf16> to vector<1x16x8xbf16>
    %37 = vector.shape_cast %33 : vector<16x8xbf16> to vector<1x16x8xbf16>
    %38 = vector.shape_cast %34 : vector<16x8xbf16> to vector<1x16x8xbf16>
    %39 = tpu.concatenate %35, %36, %37, %38 in 0 : vector<1x16x8xbf16>, vector<1x16x8xbf16>, vector<1x16x8xbf16>, vector<1x16x8xbf16> -> vector<4x16x8xbf16>
    %c0_15 = arith.constant 0 : index
    %c0_16 = arith.constant 0 : index
    %c0_17 = arith.constant 0 : index
    %40 = vector.load %arg18[%c0_15, %c0_16, %c0_17] : memref<4x8x8xbf16, #tpu.memory_space<vmem>>, vector<4x8x8xbf16>
    "tpu.trace_start"() <{level = 10 : i32, message = "hqd,hkd->hqk"}> : () -> ()
    %cst_18 = arith.constant dense<0.000000e+00> : vector<4x8x16xf32>
    %41 = tpu.matmul %40, %29, %cst_18 {dimension_numbers = #tpu.dot_dimension_numbers<[2], [2], [1], [1], [0, 0, 0, 1, 1, 1], [0], [0]>} : vector<4x8x8xbf16>, vector<4x16x8xbf16>, vector<4x8x16xf32> -> vector<4x8x16xf32>
    "tpu.trace_stop"() : () -> ()
    %c0_19 = arith.constant 0 : index
    %c0_20 = arith.constant 0 : index
    %c0_21 = arith.constant 0 : index
    %42 = vector.load %arg19[%c0_19, %c0_20, %c0_21] : memref<4x8x1xf32, #tpu.memory_space<vmem>>, vector<4x8x1xf32>
    %cst_22 = arith.constant dense<0xFF800000> : vector<4x8xf32>
    %43 = vector.multi_reduction <maximumf>, %41, %cst_22 [2] : vector<4x8x16xf32> to vector<4x8xf32>
    %44 = vector.shape_cast %43 : vector<4x8xf32> to vector<4x8x1xf32>
    %45 = arith.maximumf %42, %44 : vector<4x8x1xf32>
    %46 = arith.subf %42, %45 : vector<4x8x1xf32>
    %47 = math.exp %46 : vector<4x8x1xf32>
    %48 = vector.broadcast %45 : vector<4x8x1xf32> to vector<4x8x16xf32>
    %49 = arith.subf %41, %48 : vector<4x8x16xf32>
    %50 = math.exp %49 : vector<4x8x16xf32>
    %c0_23 = arith.constant 0 : index
    %c0_24 = arith.constant 0 : index
    %c0_25 = arith.constant 0 : index
    %51 = vector.load %arg20[%c0_23, %c0_24, %c0_25] : memref<4x8x1xf32, #tpu.memory_space<vmem>>, vector<4x8x1xf32>
    %52 = arith.mulf %47, %51 : vector<4x8x1xf32>
    %cst_26 = arith.constant dense<0.000000e+00> : vector<4x8xf32>
    %53 = vector.multi_reduction <add>, %50, %cst_26 [2] : vector<4x8x16xf32> to vector<4x8xf32>
    %54 = vector.shape_cast %53 : vector<4x8xf32> to vector<4x8x1xf32>
    %55 = arith.addf %52, %54 : vector<4x8x1xf32>
    %c0_27 = arith.constant 0 : index
    %c0_28 = arith.constant 0 : index
    %c0_29 = arith.constant 0 : index
    %56 = vector.load %arg20[%c0_27, %c0_28, %c0_29] : memref<4x8x1xf32, #tpu.memory_space<vmem>>, vector<4x8x1xf32>
    tpu.vector_store %arg20[%c0_27, %c0_28, %c0_29], %55 {strides = array<i32>} : memref<4x8x1xf32, #tpu.memory_space<vmem>>, vector<4x8x1xf32>,
    %c0_30 = arith.constant 0 : index
    %c0_31 = arith.constant 0 : index
    %c0_32 = arith.constant 0 : index
    %57 = vector.load %arg21[%c0_30, %c0_31, %c0_32] : memref<4x8x8xf32, #tpu.memory_space<vmem>>, vector<4x8x8xf32>
    %58 = vector.broadcast %47 : vector<4x8x1xf32> to vector<4x8x8xf32>
    %59 = arith.mulf %58, %57 : vector<4x8x8xf32>
    %60 = arith.truncf %50 : vector<4x8x16xf32> to vector<4x8x16xbf16>
    "tpu.trace_start"() <{level = 10 : i32, message = "hqk,hkd->hqd"}> : () -> ()
    %cst_33 = arith.constant dense<0.000000e+00> : vector<4x8x8xf32>
    %61 = tpu.matmul %60, %39, %cst_33 {dimension_numbers = #tpu.dot_dimension_numbers<[2], [1], [1], [2], [0, 0, 0, 1, 1, 2], [0], [0]>} : vector<4x8x16xbf16>, vector<4x16x8xbf16>, vector<4x8x8xf32> -> vector<4x8x8xf32>
    "tpu.trace_stop"() : () -> ()
    %62 = arith.addf %59, %61 : vector<4x8x8xf32>
    %c0_34 = arith.constant 0 : index
    %c0_35 = arith.constant 0 : index
    %c0_36 = arith.constant 0 : index
    %63 = vector.load %arg21[%c0_34, %c0_35, %c0_36] : memref<4x8x8xf32, #tpu.memory_space<vmem>>, vector<4x8x8xf32>
    tpu.vector_store %arg21[%c0_34, %c0_35, %c0_36], %62 {strides = array<i32>} : memref<4x8x8xf32, #tpu.memory_space<vmem>>, vector<4x8x8xf32>,
    %c0_37 = arith.constant 0 : index
    %c0_38 = arith.constant 0 : index
    %c0_39 = arith.constant 0 : index
    %64 = vector.load %arg19[%c0_37, %c0_38, %c0_39] : memref<4x8x1xf32, #tpu.memory_space<vmem>>, vector<4x8x1xf32>
    tpu.vector_store %arg19[%c0_37, %c0_38, %c0_39], %45 {strides = array<i32>} : memref<4x8x1xf32, #tpu.memory_space<vmem>>, vector<4x8x1xf32>,
    %c1_i32 = arith.constant 1 : i32
    %65 = arith.cmpi eq, %arg2, %c1_i32 : i32
    %66 = arith.extui %65 : i1 to i32
    %c0_i32_40 = arith.constant 0 : i32
    %67 = arith.cmpi ne, %66, %c0_i32_40 : i32
    scf.if %67 {
      %c0_41 = arith.constant 0 : index
      %c0_42 = arith.constant 0 : index
      %c0_43 = arith.constant 0 : index
      %68 = vector.load %arg21[%c0_41, %c0_42, %c0_43] : memref<4x8x8xf32, #tpu.memory_space<vmem>>, vector<4x8x8xf32>
      %c0_44 = arith.constant 0 : index
      %c0_45 = arith.constant 0 : index
      %c0_46 = arith.constant 0 : index
      %69 = vector.load %arg20[%c0_44, %c0_45, %c0_46] : memref<4x8x1xf32, #tpu.memory_space<vmem>>, vector<4x8x1xf32>
      %70 = vector.broadcast %69 : vector<4x8x1xf32> to vector<4x8x8xf32>
      %71 = arith.divf %68, %70 : vector<4x8x8xf32>
      %72 = arith.truncf %71 : vector<4x8x8xf32> to vector<4x8x8xbf16>
      %73 = vector.extract_strided_slice %72 {offsets = [0, 0, 0], sizes = [1, 8, 8], strides = [1, 1, 1]} : vector<4x8x8xbf16> to vector<1x8x8xbf16>
      %74 = vector.shape_cast %73 : vector<1x8x8xbf16> to vector<8x8xbf16>
      %75 = vector.extract_strided_slice %72 {offsets = [1, 0, 0], sizes = [1, 8, 8], strides = [1, 1, 1]} : vector<4x8x8xbf16> to vector<1x8x8xbf16>
      %76 = vector.shape_cast %75 : vector<1x8x8xbf16> to vector<8x8xbf16>
      %77 = vector.extract_strided_slice %72 {offsets = [2, 0, 0], sizes = [1, 8, 8], strides = [1, 1, 1]} : vector<4x8x8xbf16> to vector<1x8x8xbf16>
      %78 = vector.shape_cast %77 : vector<1x8x8xbf16> to vector<8x8xbf16>
      %79 = vector.extract_strided_slice %72 {offsets = [3, 0, 0], sizes = [1, 8, 8], strides = [1, 1, 1]} : vector<4x8x8xbf16> to vector<1x8x8xbf16>
      %80 = vector.shape_cast %79 : vector<1x8x8xbf16> to vector<8x8xbf16>
      %81 = tpu.concatenate %74, %76, %78, %80 in 1 : vector<8x8xbf16>, vector<8x8xbf16>, vector<8x8xbf16>, vector<8x8xbf16> -> vector<8x32xbf16>
      %c0_47 = arith.constant 0 : index
      %c0_48 = arith.constant 0 : index
      %82 = vector.load %arg13[%c0_47, %c0_48] : memref<32x32xbf16, #tpu.memory_space<vmem>>, vector<32x32xbf16>
      %cst_49 = arith.constant dense<0.000000e+00> : vector<8x32xf32>
      %83 = tpu.matmul %81, %82, %cst_49 {dimension_numbers = #tpu.dot_dimension_numbers<[1], [0], [0], [1], [0, 0, 1, 1], [], []>} : vector<8x32xbf16>, vector<32x32xbf16>, vector<8x32xf32> -> vector<8x32xf32>
      %c0_50 = arith.constant 0 : index
      %c0_51 = arith.constant 0 : index
      %84 = vector.load %arg14[%c0_50, %c0_51] : memref<1x32xf32, #tpu.memory_space<vmem>>, vector<1x32xf32>
      %85 = vector.broadcast %84 : vector<1x32xf32> to vector<8x32xf32>
      %86 = arith.addf %83, %85 : vector<8x32xf32>
      %c0_52 = arith.constant 0 : index
      %c0_53 = arith.constant 0 : index
      %c0_54 = arith.constant 0 : index
      %87 = vector.load %arg3[%c0_52, %c0_53, %c0_54] : memref<1x8x32xf32, #tpu.memory_space<vmem>>, vector<1x8x32xf32>
      %88 = vector.shape_cast %87 : vector<1x8x32xf32> to vector<8x32xf32>
      %89 = arith.addf %88, %86 : vector<8x32xf32>
      %cst_55 = arith.constant dense<0.000000e+00> : vector<8xf32>
      %90 = vector.multi_reduction <add>, %89, %cst_55 [1] : vector<8x32xf32> to vector<8xf32>
      %91 = vector.shape_cast %90 : vector<8xf32> to vector<8x1xf32>
      %cst_56 = arith.constant 3.200000e+01 : f32
      %92 = vector.broadcast %cst_56 : f32 to vector<8x1xf32>
      %93 = arith.divf %91, %92 : vector<8x1xf32>
      %94 = vector.broadcast %93 : vector<8x1xf32> to vector<8x32xf32>
      %95 = arith.subf %89, %94 : vector<8x32xf32>
      %96 = arith.mulf %95, %95 : vector<8x32xf32>
      %cst_57 = arith.constant dense<0.000000e+00> : vector<8xf32>
      %97 = vector.multi_reduction <add>, %96, %cst_57 [1] : vector<8x32xf32> to vector<8xf32>
      %98 = vector.shape_cast %97 : vector<8xf32> to vector<8x1xf32>
      %cst_58 = arith.constant 3.200000e+01 : f32
      %99 = vector.broadcast %cst_58 : f32 to vector<8x1xf32>
      %100 = arith.divf %98, %99 : vector<8x1xf32>
      %cst_59 = arith.constant 9.99999974E-6 : f32
      %101 = vector.broadcast %cst_59 : f32 to vector<8x1xf32>
      %102 = arith.addf %100, %101 : vector<8x1xf32>
      %103 = math.rsqrt %102 : vector<8x1xf32>
      %104 = vector.broadcast %103 : vector<8x1xf32> to vector<8x32xf32>
      %105 = arith.mulf %95, %104 : vector<8x32xf32>
      %c0_60 = arith.constant 0 : index
      %c0_61 = arith.constant 0 : index
      %106 = vector.load %arg15[%c0_60, %c0_61] : memref<1x32xf32, #tpu.memory_space<vmem>>, vector<1x32xf32>
      %107 = vector.broadcast %106 : vector<1x32xf32> to vector<8x32xf32>
      %108 = arith.mulf %105, %107 : vector<8x32xf32>
      %c0_62 = arith.constant 0 : index
      %c0_63 = arith.constant 0 : index
      %109 = vector.load %arg16[%c0_62, %c0_63] : memref<1x32xf32, #tpu.memory_space<vmem>>, vector<1x32xf32>
      %110 = vector.broadcast %109 : vector<1x32xf32> to vector<8x32xf32>
      %111 = arith.addf %108, %110 : vector<8x32xf32>
      %c0_64 = arith.constant 0 : index
      %c0_65 = arith.constant 0 : index
      %c0_66 = arith.constant 0 : index
      %112 = vector.load %arg17[%c0_64, %c0_65, %c0_66] : memref<1x8x32xf32, #tpu.memory_space<vmem>>, vector<1x8x32xf32>
      %113 = vector.shape_cast %112 : vector<1x8x32xf32> to vector<8x32xf32>
      %114 = vector.shape_cast %111 : vector<8x32xf32> to vector<1x8x32xf32>
      tpu.vector_store %arg17[%c0_64, %c0_65, %c0_66], %114 {strides = array<i32>} : memref<1x8x32xf32, #tpu.memory_space<vmem>>, vector<1x8x32xf32>,
    } else {
    }
    return
  }
  func.func @transform_0(%arg0: i32, %arg1: i32, %arg2: i32) -> (i32, i32, i32) {
    %c0_i32 = arith.constant 0 : i32
    %c0_i32_0 = arith.constant 0 : i32
    return %arg0, %arg1, %c0_i32 : i32, i32, i32
  }
  func.func @transform_1(%arg0: i32, %arg1: i32, %arg2: i32) -> (i32, i32, i32) {
    %c0_i32 = arith.constant 0 : i32
    %c0_i32_0 = arith.constant 0 : i32
    return %arg0, %arg1, %c0_i32 : i32, i32, i32
  }
  func.func @transform_2(%arg0: i32, %arg1: i32, %arg2: i32) -> (i32, i32, i32) {
    %c0_i32 = arith.constant 0 : i32
    %c0_i32_0 = arith.constant 0 : i32
    return %arg0, %arg2, %c0_i32 : i32, i32, i32
  }
  func.func @transform_3(%arg0: i32, %arg1: i32, %arg2: i32) -> (i32, i32, i32) {
    %c0_i32 = arith.constant 0 : i32
    %c0_i32_0 = arith.constant 0 : i32
    return %arg0, %arg2, %c0_i32 : i32, i32, i32
  }
  func.func @transform_4(%arg0: i32, %arg1: i32, %arg2: i32) -> (i32, i32) {
    %c0_i32 = arith.constant 0 : i32
    %c0_i32_0 = arith.constant 0 : i32
    %c0_i32_1 = arith.constant 0 : i32
    return %c0_i32, %c0_i32_0 : i32, i32
  }
  func.func @transform_5(%arg0: i32, %arg1: i32, %arg2: i32) -> (i32, i32) {
    %c0_i32 = arith.constant 0 : i32
    %c0_i32_0 = arith.constant 0 : i32
    %c0_i32_1 = arith.constant 0 : i32
    return %c0_i32, %c0_i32_0 : i32, i32
  }
  func.func @transform_6(%arg0: i32, %arg1: i32, %arg2: i32) -> (i32, i32) {
    %c0_i32 = arith.constant 0 : i32
    %c0_i32_0 = arith.constant 0 : i32
    %c0_i32_1 = arith.constant 0 : i32
    return %c0_i32, %c0_i32_0 : i32, i32
  }
  func.func @transform_7(%arg0: i32, %arg1: i32, %arg2: i32) -> (i32, i32) {
    %c0_i32 = arith.constant 0 : i32
    %c0_i32_0 = arith.constant 0 : i32
    %c0_i32_1 = arith.constant 0 : i32
    return %c0_i32, %c0_i32_0 : i32, i32
  }
  func.func @transform_8(%arg0: i32, %arg1: i32, %arg2: i32) -> (i32, i32) {
    %c0_i32 = arith.constant 0 : i32
    %c0_i32_0 = arith.constant 0 : i32
    %c0_i32_1 = arith.constant 0 : i32
    return %c0_i32, %c0_i32_0 : i32, i32
  }
  func.func @transform_9(%arg0: i32, %arg1: i32, %arg2: i32) -> (i32, i32) {
    %c0_i32 = arith.constant 0 : i32
    %c0_i32_0 = arith.constant 0 : i32
    %c0_i32_1 = arith.constant 0 : i32
    return %c0_i32, %c0_i32_0 : i32, i32
  }
  func.func @transform_10(%arg0: i32, %arg1: i32, %arg2: i32) -> (i32, i32) {
    %c0_i32 = arith.constant 0 : i32
    %c0_i32_0 = arith.constant 0 : i32
    %c0_i32_1 = arith.constant 0 : i32
    return %c0_i32, %c0_i32_0 : i32, i32
  }
  func.func @transform_11(%arg0: i32, %arg1: i32, %arg2: i32) -> (i32, i32) {
    %c0_i32 = arith.constant 0 : i32
    %c0_i32_0 = arith.constant 0 : i32
    %c0_i32_1 = arith.constant 0 : i32
    return %c0_i32, %c0_i32_0 : i32, i32
  }
  func.func @transform_12(%arg0: i32, %arg1: i32, %arg2: i32) -> (i32, i32) {
    %c0_i32 = arith.constant 0 : i32
    %c0_i32_0 = arith.constant 0 : i32
    %c0_i32_1 = arith.constant 0 : i32
    return %c0_i32, %c0_i32_0 : i32, i32
  }
  func.func @transform_13(%arg0: i32, %arg1: i32, %arg2: i32) -> (i32, i32) {
    %c0_i32 = arith.constant 0 : i32
    %c0_i32_0 = arith.constant 0 : i32
    %c0_i32_1 = arith.constant 0 : i32
    return %c0_i32, %c0_i32_0 : i32, i32
  }
  func.func @transform_14(%arg0: i32, %arg1: i32, %arg2: i32) -> (i32, i32, i32) {
    %c0_i32 = arith.constant 0 : i32
    %c0_i32_0 = arith.constant 0 : i32
    return %arg0, %arg1, %c0_i32 : i32, i32, i32
  }
}

</mosaic_0001>

<llo_original>
// kernel: tpu_custom_call.1
$region0: #{tpu_custom_call.1}
  #allocation0 [shape = 'u32[]', space=smem, size = 0x4, offset = 0x4, fixed_abs, tag = 'smem constant byte address 0x4 - core index']
  #allocation1 [shape = 'u32[144,128]{1,0:T(1,128)}', space=vmem, size = 0x12000, scoped, tag = 'internal scratch']
  #allocation2 [shape = 'bf16[4,8,8]{2,1,0:T(8,128)(2,1)}', space=vmem, size = 0x2000, scoped, tag = 'scratch operand']
  #allocation3 [shape = 'f32[4,8,1]{2,1,0:T(8,128)}', space=vmem, size = 0x4000, scoped, tag = 'scratch operand']
  #allocation4 [shape = 'f32[4,8,1]{2,1,0:T(8,128)}', space=vmem, size = 0x4000, scoped, tag = 'scratch operand']
  #allocation5 [shape = 'f32[4,8,8]{2,1,0:T(8,128)}', space=vmem, size = 0x4000, scoped, tag = 'scratch operand']
  %s0 = inlined_call_operand.hbm [shape: f32[2,16,32], index: 0, kind: input, shape index: {}]
  %s1 = inlined_call_operand.hbm [shape: f32[2,16,32], index: 1, kind: input, shape index: {}]
  %s2 = inlined_call_operand.hbm [shape: f32[2,32,32], index: 2, kind: input, shape index: {}]
  %s3 = inlined_call_operand.hbm [shape: f32[2,32,32], index: 3, kind: input, shape index: {}]
  %s4 = inlined_call_operand.hbm [shape: bf16[32,32], index: 4, kind: input, shape index: {}]
  %s5 = inlined_call_operand.vmem [shape: bf16[32,32], index: 5, kind: input, shape index: {}]
  %s6 = inlined_call_operand.hbm [shape: bf16[32,32], index: 6, kind: input, shape index: {}]
  %s7 = inlined_call_operand.vmem [shape: f32[1,32], index: 7, kind: input, shape index: {}]
  %s8 = inlined_call_operand.vmem [shape: f32[1,32], index: 8, kind: input, shape index: {}]
  %s9 = inlined_call_operand.hbm [shape: f32[1,32], index: 9, kind: input, shape index: {}]
  %s10 = inlined_call_operand.vmem [shape: bf16[32,32], index: 10, kind: input, shape index: {}]
  %s11 = inlined_call_operand.vmem [shape: f32[1,32], index: 11, kind: input, shape index: {}]
  %s12 = inlined_call_operand.vmem [shape: f32[1,32], index: 12, kind: input, shape index: {}]
  %s13 = inlined_call_operand.vmem [shape: f32[1,32], index: 13, kind: input, shape index: {}]
  %s14 = inlined_call_operand.hbm [shape: f32[2,16,32], index: 14, kind: output, shape index: {}]
  %s15 = sld [smem:[#allocation0]]
  $region125: #{tpu_custom_call.1} parent=0
    _
  %s17 = ssub.s32 1, %s15
  %s18 = scalar_select 0, %s17, %s15
  $region1: #{tpu_custom_call.1} parent=0
    #allocation6 [shape = 'u8[8192]{0}', space=vmem, size = 0x2000, scoped, tag = 'input window, operand 0']
    #allocation7 [shape = 's32[2]{0}', space=sflag, size = 0x8, scoped, tag = 'scoped memory for tpu_custom_call.1']
    #allocation8 [shape = 's32[2]{0}', space=sflag, size = 0x8, scoped, tag = 'scoped memory for tpu_custom_call.1']
    #allocation9 [shape = 'u8[8192]{0}', space=vmem, size = 0x2000, scoped, tag = 'input window, operand 1']
    #allocation10 [shape = 's32[2]{0}', space=sflag, size = 0x8, scoped, tag = 'scoped memory for tpu_custom_call.1']
    #allocation11 [shape = 'u8[16384]{0}', space=vmem, size = 0x4000, scoped, tag = 'input window, operand 2']
    #allocation12 [shape = 'u8[16384]{0}', space=vmem, size = 0x4000, scoped, tag = 'input window, operand 3']
    #allocation13 [shape = 's32[2]{0}', space=sflag, size = 0x8, scoped, tag = 'scoped memory for tpu_custom_call.1']
    #allocation14 [shape = 'u8[8192]{0}', space=vmem, size = 0x2000, scoped, tag = 'input window, operand 4, single buffered']
    #allocation15 [shape = 'u8[8192]{0}', space=vmem, size = 0x2000, scoped, tag = 'input window, operand 6, single buffered']
    #allocation16 [shape = 's32[1]{0}', space=sflag, size = 0x4, scoped, tag = 'scoped memory for tpu_custom_call.1']
    #allocation17 [shape = 'u8[512]{0}', space=vmem, size = 0x400, scoped, tag = 'input window, operand 9, single buffered']
    #allocation18 [shape = 'u8[8192]{0}', space=vmem, size = 0x2000, scoped, tag = 'output window, operand 0']
    %19 = vsyncpa [#allocation7], 0
    %s20 = scalar_lea.sflag [#allocation7], 1
    %21 = vsyncpa %s20, 0
    %22 = vsyncpa [#allocation10], 0
    %s23 = scalar_lea.sflag [#allocation10], 1
    %24 = vsyncpa %s23, 0
    %25 = vsyncpa [#allocation13], 0
    %s26 = scalar_lea.sflag [#allocation13], 1
    %27 = vsyncpa %s26, 0
    %28 = vsyncpa [#allocation16], 0
    %29 = vsyncpa [#allocation8], 0
    %s30 = scalar_lea.sflag [#allocation8], 1
    %31 = vsyncpa %s30, 0
    loop: start=0, step=1, limit=10
    $region2: #{tpu_custom_call.1} parent=1 // loop_pre_header
      _
    $region3: #{tpu_custom_call.1} parent=1 // loop_header
      %s33 = sphi 0, %s37
      %p34 = scmp.ge.s32.totalorder %s33, 10
      %s40 = sphi 0, %s59
      %s41 = sphi 0, %s55
      %s42 = sphi 0, %s51
      %s43 = sphi 0, %s40
      %s44 = sphi 0, %s41
      %s45 = sphi 0, %s42
      %s46 = sphi 0, %s43
      %s47 = sphi 0, %s44
      %s48 = sphi 0, %s45
      %s64 = sphi 0, %s66
      %s67 = sphi 0, %s64
      %s68 = sphi 0, %s67
      %s84 = sphi 0, %s68
      %s92 = sphi 0, %s94
      %s95 = sphi 0, %s92
      %s96 = sphi 0, %s95
      %s112 = sphi 0, %s96
      %s120 = sphi 0, %s122
      %s123 = sphi 0, %s120
      %s124 = sphi 0, %s123
      %s140 = sphi 0, %s124
      %s148 = sphi 0, %s150
      %s151 = sphi 0, %s148
      %s152 = sphi 0, %s151
      %s168 = sphi 0, %s152
      %s172 = sphi 0, %s172
      %s174 = sphi 0, %s172
      %s175 = sphi 0, %s174
      %s189 = sphi 0, %s175
      %s193 = sphi 0, %s193
      %s195 = sphi 0, %s193
      %s196 = sphi 0, %s195
      %s210 = sphi 0, %s196
      %s214 = sphi 0, %s214
      %s216 = sphi 0, %s214
      %s217 = sphi 0, %s216
      %s231 = sphi 0, %s217
      %s235 = sphi 0, %s235
      %s237 = sphi 0, %s235
      %s238 = sphi 0, %s237
      %s252 = sphi 0, %s238
      %s256 = sphi 0, %s256
      %s258 = sphi 0, %s256
      %s259 = sphi 0, %s258
      %s273 = sphi 0, %s259
      %s277 = sphi 0, %s277
      %s279 = sphi 0, %s277
      %s280 = sphi 0, %s279
      %s294 = sphi 0, %s280
      %s298 = sphi 0, %s298
      %s300 = sphi 0, %s298
      %s301 = sphi 0, %s300
      %s315 = sphi 0, %s301
      %s319 = sphi 0, %s319
      %s321 = sphi 0, %s319
      %s322 = sphi 0, %s321
      %s336 = sphi 0, %s322
      %s340 = sphi 0, %s340
      %s342 = sphi 0, %s340
      %s343 = sphi 0, %s342
      %s357 = sphi 0, %s343
      %s361 = sphi 0, %s361
      %s363 = sphi 0, %s361
      %s364 = sphi 0, %s363
      %s378 = sphi 0, %s364
      %s386 = sphi 0, %s388
      %s389 = sphi 0, %s386
      %s390 = sphi 0, %s389
      %s406 = sphi 0, %s390
    $region4: #{tpu_custom_call.1} parent=1 // loop_header_branch
      %36 = sbr.rel (%p34) target = $region8
    $region5: #{tpu_custom_call.1} parent=1 // loop_body
      %s38 = ssub.s32 %s33, 1
      %s39 = ssub.s32 %s33, 2
      %s49 = sadd.s32 1, %s42
      %p50 = scmp.ge.s32.totalorder %s49, 2
      %s51 = scalar_select %p50, 0, %s49
      %s52 = sadd.s32 1, %s41
      %s53 = scalar_select %p50, %s52, %s41
      %p54 = scmp.ge.s32.totalorder %s53, 2
      %s55 = scalar_select %p54, 0, %s53
      %s56 = sadd.s32 1, %s40
      %s57 = scalar_select %p54, %s56, %s40
      %p58 = scmp.ge.s32.totalorder %s57, 2
      %s59 = scalar_select %p58, 0, %s57
      %s60 = ssub.s32 %s40, %s59
      %s61 = ssub.s32 %s41, %s55
      %s62 = sor.u32 %s60, %s61
      %p63 = scmp.eq.s32.totalorder %s62, 0
      %s65 = sadd.s32 %s64, 1
      %s66 = scalar_select %p63, %s64, %s65
      %p69 = pneg %p63
      %p70 = scmp.eq.s32.totalorder %s33, 7
      %p71 = por %p69, %p70
      %p72 = scmp.ne.s32.totalorder %s64, %s67
      %p73 = scmp.eq.s32.totalorder %s33, 0
      %p74 = por %p72, %p73
      %p75 = scmp.ne.s32.totalorder %s64, %s67
      %p76 = scmp.eq.s32.totalorder %s38, 7
      %p77 = por %p75, %p76
      %p78 = scmp.ne.s32.totalorder %s67, %s68
      %p79 = scmp.eq.s32.totalorder %s38, 0
      %p80 = por %p78, %p79
      %p81 = scmp.ne.s32.totalorder %s67, %s68
      %p82 = scmp.eq.s32.totalorder %s39, 7
      %p83 = por %p81, %p82
      %p85 = scmp.ne.s32.totalorder %s68, %s84
      %p86 = scmp.eq.s32.totalorder %s39, 0
      %p87 = por %p85, %p86
      %s88 = ssub.s32 %s40, %s59
      %s89 = ssub.s32 %s41, %s55
      %s90 = sor.u32 %s88, %s89
      %p91 = scmp.eq.s32.totalorder %s90, 0
      %s93 = sadd.s32 %s92, 1
      %s94 = scalar_select %p91, %s92, %s93
      %p97 = pneg %p91
      %p98 = scmp.eq.s32.totalorder %s33, 7
      %p99 = por %p97, %p98
      %p100 = scmp.ne.s32.totalorder %s92, %s95
      %p101 = scmp.eq.s32.totalorder %s33, 0
      %p102 = por %p100, %p101
      %p103 = scmp.ne.s32.totalorder %s92, %s95
      %p104 = scmp.eq.s32.totalorder %s38, 7
      %p105 = por %p103, %p104
      %p106 = scmp.ne.s32.totalorder %s95, %s96
      %p107 = scmp.eq.s32.totalorder %s38, 0
      %p108 = por %p106, %p107
      %p109 = scmp.ne.s32.totalorder %s95, %s96
      %p110 = scmp.eq.s32.totalorder %s39, 7
      %p111 = por %p109, %p110
      %p113 = scmp.ne.s32.totalorder %s96, %s112
      %p114 = scmp.eq.s32.totalorder %s39, 0
      %p115 = por %p113, %p114
      %s116 = ssub.s32 %s40, %s59
      %s117 = ssub.s32 %s42, %s51
      %s118 = sor.u32 %s116, %s117
      %p119 = scmp.eq.s32.totalorder %s118, 0
      %s121 = sadd.s32 %s120, 1
      %s122 = scalar_select %p119, %s120, %s121
      %p125 = pneg %p119
      %p126 = scmp.eq.s32.totalorder %s33, 7
      %p127 = por %p125, %p126
      %p128 = scmp.ne.s32.totalorder %s120, %s123
      %p129 = scmp.eq.s32.totalorder %s33, 0
      %p130 = por %p128, %p129
      %p131 = scmp.ne.s32.totalorder %s120, %s123
      %p132 = scmp.eq.s32.totalorder %s38, 7
      %p133 = por %p131, %p132
      %p134 = scmp.ne.s32.totalorder %s123, %s124
      %p135 = scmp.eq.s32.totalorder %s38, 0
      %p136 = por %p134, %p135
      %p137 = scmp.ne.s32.totalorder %s123, %s124
      %p138 = scmp.eq.s32.totalorder %s39, 7
      %p139 = por %p137, %p138
      %p141 = scmp.ne.s32.totalorder %s124, %s140
      %p142 = scmp.eq.s32.totalorder %s39, 0
      %p143 = por %p141, %p142
      %s144 = ssub.s32 %s40, %s59
      %s145 = ssub.s32 %s42, %s51
      %s146 = sor.u32 %s144, %s145
      %p147 = scmp.eq.s32.totalorder %s146, 0
      %s149 = sadd.s32 %s148, 1
      %s150 = scalar_select %p147, %s148, %s149
      %p153 = pneg %p147
      %p154 = scmp.eq.s32.totalorder %s33, 7
      %p155 = por %p153, %p154
      %p156 = scmp.ne.s32.totalorder %s148, %s151
      %p157 = scmp.eq.s32.totalorder %s33, 0
      %p158 = por %p156, %p157
      %p159 = scmp.ne.s32.totalorder %s148, %s151
      %p160 = scmp.eq.s32.totalorder %s38, 7
      %p161 = por %p159, %p160
      %p162 = scmp.ne.s32.totalorder %s151, %s152
      %p163 = scmp.eq.s32.totalorder %s38, 0
      %p164 = por %p162, %p163
      %p165 = scmp.ne.s32.totalorder %s151, %s152
      %p166 = scmp.eq.s32.totalorder %s39, 7
      %p167 = por %p165, %p166
      %p169 = scmp.ne.s32.totalorder %s152, %s168
      %p170 = scmp.eq.s32.totalorder %s39, 0
      %p171 = por %p169, %p170
      %s173 = sadd.s32 %s172, 1
      %p176 = scmp.eq.s32.totalorder %s33, 7
      %p177 = scmp.ne.s32.totalorder %s172, %s174
      %p178 = scmp.eq.s32.totalorder %s33, 0
      %p179 = por %p177, %p178
      %p180 = scmp.ne.s32.totalorder %s172, %s174
      %p181 = scmp.eq.s32.totalorder %s38, 7
      %p182 = por %p180, %p181
      %p183 = scmp.ne.s32.totalorder %s174, %s175
      %p184 = scmp.eq.s32.totalorder %s38, 0
      %p185 = por %p183, %p184
      %p186 = scmp.ne.s32.totalorder %s174, %s175
      %p187 = scmp.eq.s32.totalorder %s39, 7
      %p188 = por %p186, %p187
      %p190 = scmp.ne.s32.totalorder %s175, %s189
      %p191 = scmp.eq.s32.totalorder %s39, 0
      %p192 = por %p190, %p191
      %s194 = sadd.s32 %s193, 1
      %p197 = scmp.eq.s32.totalorder %s33, 7
      %p198 = scmp.ne.s32.totalorder %s193, %s195
      %p199 = scmp.eq.s32.totalorder %s33, 0
      %p200 = por %p198, %p199
      %p201 = scmp.ne.s32.totalorder %s193, %s195
      %p202 = scmp.eq.s32.totalorder %s38, 7
      %p203 = por %p201, %p202
      %p204 = scmp.ne.s32.totalorder %s195, %s196
      %p205 = scmp.eq.s32.totalorder %s38, 0
      %p206 = por %p204, %p205
      %p207 = scmp.ne.s32.totalorder %s195, %s196
      %p208 = scmp.eq.s32.totalorder %s39, 7
      %p209 = por %p207, %p208
      %p211 = scmp.ne.s32.totalorder %s196, %s210
      %p212 = scmp.eq.s32.totalorder %s39, 0
      %p213 = por %p211, %p212
      %s215 = sadd.s32 %s214, 1
      %p218 = scmp.eq.s32.totalorder %s33, 7
      %p219 = scmp.ne.s32.totalorder %s214, %s216
      %p220 = scmp.eq.s32.totalorder %s33, 0
      %p221 = por %p219, %p220
      %p222 = scmp.ne.s32.totalorder %s214, %s216
      %p223 = scmp.eq.s32.totalorder %s38, 7
      %p224 = por %p222, %p223
      %p225 = scmp.ne.s32.totalorder %s216, %s217
      %p226 = scmp.eq.s32.totalorder %s38, 0
      %p227 = por %p225, %p226
      %p228 = scmp.ne.s32.totalorder %s216, %s217
      %p229 = scmp.eq.s32.totalorder %s39, 7
      %p230 = por %p228, %p229
      %p232 = scmp.ne.s32.totalorder %s217, %s231
      %p233 = scmp.eq.s32.totalorder %s39, 0
      %p234 = por %p232, %p233
      %s236 = sadd.s32 %s235, 1
      %p239 = scmp.eq.s32.totalorder %s33, 7
      %p240 = scmp.ne.s32.totalorder %s235, %s237
      %p241 = scmp.eq.s32.totalorder %s33, 0
      %p242 = por %p240, %p241
      %p243 = scmp.ne.s32.totalorder %s235, %s237
      %p244 = scmp.eq.s32.totalorder %s38, 7
      %p245 = por %p243, %p244
      %p246 = scmp.ne.s32.totalorder %s237, %s238
      %p247 = scmp.eq.s32.totalorder %s38, 0
      %p248 = por %p246, %p247
      %p249 = scmp.ne.s32.totalorder %s237, %s238
      %p250 = scmp.eq.s32.totalorder %s39, 7
      %p251 = por %p249, %p250
      %p253 = scmp.ne.s32.totalorder %s238, %s252
      %p254 = scmp.eq.s32.totalorder %s39, 0
      %p255 = por %p253, %p254
      %s257 = sadd.s32 %s256, 1
      %p260 = scmp.eq.s32.totalorder %s33, 7
      %p261 = scmp.ne.s32.totalorder %s256, %s258
      %p262 = scmp.eq.s32.totalorder %s33, 0
      %p263 = por %p261, %p262
      %p264 = scmp.ne.s32.totalorder %s256, %s258
      %p265 = scmp.eq.s32.totalorder %s38, 7
      %p266 = por %p264, %p265
      %p267 = scmp.ne.s32.totalorder %s258, %s259
      %p268 = scmp.eq.s32.totalorder %s38, 0
      %p269 = por %p267, %p268
      %p270 = scmp.ne.s32.totalorder %s258, %s259
      %p271 = scmp.eq.s32.totalorder %s39, 7
      %p272 = por %p270, %p271
      %p274 = scmp.ne.s32.totalorder %s259, %s273
      %p275 = scmp.eq.s32.totalorder %s39, 0
      %p276 = por %p274, %p275
      %s278 = sadd.s32 %s277, 1
      %p281 = scmp.eq.s32.totalorder %s33, 7
      %p282 = scmp.ne.s32.totalorder %s277, %s279
      %p283 = scmp.eq.s32.totalorder %s33, 0
      %p284 = por %p282, %p283
      %p285 = scmp.ne.s32.totalorder %s277, %s279
      %p286 = scmp.eq.s32.totalorder %s38, 7
      %p287 = por %p285, %p286
      %p288 = scmp.ne.s32.totalorder %s279, %s280
      %p289 = scmp.eq.s32.totalorder %s38, 0
      %p290 = por %p288, %p289
      %p291 = scmp.ne.s32.totalorder %s279, %s280
      %p292 = scmp.eq.s32.totalorder %s39, 7
      %p293 = por %p291, %p292
      %p295 = scmp.ne.s32.totalorder %s280, %s294
      %p296 = scmp.eq.s32.totalorder %s39, 0
      %p297 = por %p295, %p296
      %s299 = sadd.s32 %s298, 1
      %p302 = scmp.eq.s32.totalorder %s33, 7
      %p303 = scmp.ne.s32.totalorder %s298, %s300
      %p304 = scmp.eq.s32.totalorder %s33, 0
      %p305 = por %p303, %p304
      %p306 = scmp.ne.s32.totalorder %s298, %s300
      %p307 = scmp.eq.s32.totalorder %s38, 7
      %p308 = por %p306, %p307
      %p309 = scmp.ne.s32.totalorder %s300, %s301
      %p310 = scmp.eq.s32.totalorder %s38, 0
      %p311 = por %p309, %p310
      %p312 = scmp.ne.s32.totalorder %s300, %s301
      %p313 = scmp.eq.s32.totalorder %s39, 7
      %p314 = por %p312, %p313
      %p316 = scmp.ne.s32.totalorder %s301, %s315
      %p317 = scmp.eq.s32.totalorder %s39, 0
      %p318 = por %p316, %p317
      %s320 = sadd.s32 %s319, 1
      %p323 = scmp.eq.s32.totalorder %s33, 7
      %p324 = scmp.ne.s32.totalorder %s319, %s321
      %p325 = scmp.eq.s32.totalorder %s33, 0
      %p326 = por %p324, %p325
      %p327 = scmp.ne.s32.totalorder %s319, %s321
      %p328 = scmp.eq.s32.totalorder %s38, 7
      %p329 = por %p327, %p328
      %p330 = scmp.ne.s32.totalorder %s321, %s322
      %p331 = scmp.eq.s32.totalorder %s38, 0
      %p332 = por %p330, %p331
      %p333 = scmp.ne.s32.totalorder %s321, %s322
      %p334 = scmp.eq.s32.totalorder %s39, 7
      %p335 = por %p333, %p334
      %p337 = scmp.ne.s32.totalorder %s322, %s336
      %p338 = scmp.eq.s32.totalorder %s39, 0
      %p339 = por %p337, %p338
      %s341 = sadd.s32 %s340, 1
      %p344 = scmp.eq.s32.totalorder %s33, 7
      %p345 = scmp.ne.s32.totalorder %s340, %s342
      %p346 = scmp.eq.s32.totalorder %s33, 0
      %p347 = por %p345, %p346
      %p348 = scmp.ne.s32.totalorder %s340, %s342
      %p349 = scmp.eq.s32.totalorder %s38, 7
      %p350 = por %p348, %p349
      %p351 = scmp.ne.s32.totalorder %s342, %s343
      %p352 = scmp.eq.s32.totalorder %s38, 0
      %p353 = por %p351, %p352
      %p354 = scmp.ne.s32.totalorder %s342, %s343
      %p355 = scmp.eq.s32.totalorder %s39, 7
      %p356 = por %p354, %p355
      %p358 = scmp.ne.s32.totalorder %s343, %s357
      %p359 = scmp.eq.s32.totalorder %s39, 0
      %p360 = por %p358, %p359
      %s362 = sadd.s32 %s361, 1
      %p365 = scmp.eq.s32.totalorder %s33, 7
      %p366 = scmp.ne.s32.totalorder %s361, %s363
      %p367 = scmp.eq.s32.totalorder %s33, 0
      %p368 = por %p366, %p367
      %p369 = scmp.ne.s32.totalorder %s361, %s363
      %p370 = scmp.eq.s32.totalorder %s38, 7
      %p371 = por %p369, %p370
      %p372 = scmp.ne.s32.totalorder %s363, %s364
      %p373 = scmp.eq.s32.totalorder %s38, 0
      %p374 = por %p372, %p373
      %p375 = scmp.ne.s32.totalorder %s363, %s364
      %p376 = scmp.eq.s32.totalorder %s39, 7
      %p377 = por %p375, %p376
      %p379 = scmp.ne.s32.totalorder %s364, %s378
      %p380 = scmp.eq.s32.totalorder %s39, 0
      %p381 = por %p379, %p380
      %s382 = ssub.s32 %s40, %s59
      %s383 = ssub.s32 %s41, %s55
      %s384 = sor.u32 %s382, %s383
      %p385 = scmp.eq.s32.totalorder %s384, 0
      %s387 = sadd.s32 %s386, 1
      %s388 = scalar_select %p385, %s386, %s387
      %p391 = pneg %p385
      %p392 = scmp.eq.s32.totalorder %s33, 7
      %p393 = por %p391, %p392
      %p394 = scmp.ne.s32.totalorder %s386, %s389
      %p395 = scmp.eq.s32.totalorder %s33, 0
      %p396 = por %p394, %p395
      %p397 = scmp.ne.s32.totalorder %s386, %s389
      %p398 = scmp.eq.s32.totalorder %s38, 7
      %p399 = por %p397, %p398
      %p400 = scmp.ne.s32.totalorder %s389, %s390
      %p401 = scmp.eq.s32.totalorder %s38, 0
      %p402 = por %p400, %p401
      %p403 = scmp.ne.s32.totalorder %s389, %s390
      %p404 = scmp.eq.s32.totalorder %s39, 7
      %p405 = por %p403, %p404
      %p407 = scmp.ne.s32.totalorder %s390, %s406
      %p408 = scmp.eq.s32.totalorder %s39, 0
      %p409 = por %p407, %p408
      %p410 = scmp.le.s32.totalorder 1, %s33
      %p411 = scmp.lt.s32.totalorder %s33, 9
      %p412 = pnand %p410, %p411
      %p413 = pneg %p412
      // Predicated region
      $region9: #{tpu_custom_call.1} parent=5 // pred_check
        _
      $region10: #{tpu_custom_call.1} parent=5 // pred_check_branch
        %415 = sbr.rel (%p412) target = $region12
      $region11: #{tpu_custom_call.1} parent=5 // pred_region
        %s416 = ssub.s32 %s33, 1
        // Predicated region
        $region13: #{tpu_custom_call.1} parent=11 // pred_check
          %p417 = pneg %p185
        $region14: #{tpu_custom_call.1} parent=11 // pred_check_branch
          %419 = sbr.rel (%p417) target = $region16
        $region15: #{tpu_custom_call.1} parent=11 // pred_region
          %s421 = ssub.s32 256, 256
          %422 = vsyncadd [#allocation13], %s421
          %s423 = sshll.u32 [#allocation14], 4
          %s424 = int_to_ptr.vmem [resolvable:$true] %s423
          %429 = dma.hbm_to_vmem [thread:$0]  %s4, 256, %s424, [#allocation13], 64, 64, 4
        $region16: #{tpu_custom_call.1} parent=11 // pred_fallthru
          _
        // Predicated region
        $region17: #{tpu_custom_call.1} parent=11 // pred_check
          %p430 = pneg %p206
        $region18: #{tpu_custom_call.1} parent=11 // pred_check_branch
          %432 = sbr.rel (%p430) target = $region20
        $region19: #{tpu_custom_call.1} parent=11 // pred_region
          _
        $region20: #{tpu_custom_call.1} parent=11 // pred_fallthru
          _
        // Predicated region
        $region21: #{tpu_custom_call.1} parent=11 // pred_check
          %p433 = pneg %p227
        $region22: #{tpu_custom_call.1} parent=11 // pred_check_branch
          %435 = sbr.rel (%p433) target = $region24
        $region23: #{tpu_custom_call.1} parent=11 // pred_region
          %s437 = ssub.s32 256, 256
          %438 = vsyncadd [#allocation16], %s437
          %s439 = sshll.u32 [#allocation15], 4
          %s440 = int_to_ptr.vmem [resolvable:$true] %s439
          %445 = dma.hbm_to_vmem [thread:$0]  %s6, 256, %s440, [#allocation16], 64, 64, 4
        $region24: #{tpu_custom_call.1} parent=11 // pred_fallthru
          _
        // Predicated region
        $region25: #{tpu_custom_call.1} parent=11 // pred_check
          %p446 = pneg %p248
        $region26: #{tpu_custom_call.1} parent=11 // pred_check_branch
          %448 = sbr.rel (%p446) target = $region28
        $region27: #{tpu_custom_call.1} parent=11 // pred_region
          _
        $region28: #{tpu_custom_call.1} parent=11 // pred_fallthru
          _
        // Predicated region
        $region29: #{tpu_custom_call.1} parent=11 // pred_check
          %p449 = pneg %p269
        $region30: #{tpu_custom_call.1} parent=11 // pred_check_branch
          %451 = sbr.rel (%p449) target = $region32
        $region31: #{tpu_custom_call.1} parent=11 // pred_region
          _
        $region32: #{tpu_custom_call.1} parent=11 // pred_fallthru
          _
        // Predicated region
        $region33: #{tpu_custom_call.1} parent=11 // pred_check
          %p452 = pneg %p290
        $region34: #{tpu_custom_call.1} parent=11 // pred_check_branch
          %454 = sbr.rel (%p452) target = $region36
        $region35: #{tpu_custom_call.1} parent=11 // pred_region
          %s456 = ssub.s32 16, 16
          %457 = vsyncadd [#allocation16], %s456
          %s459 = sshll.u32 [#allocation17], 4
          %s460 = int_to_ptr.vmem [resolvable:$true] %s459
          %462 = dma.hbm_to_vmem [thread:$0]  %s9, 16, %s460, [#allocation16]
        $region36: #{tpu_custom_call.1} parent=11 // pred_fallthru
          _
        // Predicated region
        $region37: #{tpu_custom_call.1} parent=11 // pred_check
          %p463 = pneg %p311
        $region38: #{tpu_custom_call.1} parent=11 // pred_check_branch
          %465 = sbr.rel (%p463) target = $region40
        $region39: #{tpu_custom_call.1} parent=11 // pred_region
          _
        $region40: #{tpu_custom_call.1} parent=11 // pred_fallthru
          _
        // Predicated region
        $region41: #{tpu_custom_call.1} parent=11 // pred_check
          %p466 = pneg %p332
        $region42: #{tpu_custom_call.1} parent=11 // pred_check_branch
          %468 = sbr.rel (%p466) target = $region44
        $region43: #{tpu_custom_call.1} parent=11 // pred_region
          _
        $region44: #{tpu_custom_call.1} parent=11 // pred_fallthru
          _
        // Predicated region
        $region45: #{tpu_custom_call.1} parent=11 // pred_check
          %p469 = pneg %p353
        $region46: #{tpu_custom_call.1} parent=11 // pred_check_branch
          %471 = sbr.rel (%p469) target = $region48
        $region47: #{tpu_custom_call.1} parent=11 // pred_region
          _
        $region48: #{tpu_custom_call.1} parent=11 // pred_fallthru
          _
        // Predicated region
        $region49: #{tpu_custom_call.1} parent=11 // pred_check
          %p472 = pneg %p374
        $region50: #{tpu_custom_call.1} parent=11 // pred_check_branch
          %474 = sbr.rel (%p472) target = $region52
        $region51: #{tpu_custom_call.1} parent=11 // pred_region
          _
        $region52: #{tpu_custom_call.1} parent=11 // pred_fallthru
          _
      $region12: #{tpu_custom_call.1} parent=5 // pred_fallthru
        _
      %p475 = scmp.lt.s32.totalorder %s33, 8
      // Predicated region
      $region53: #{tpu_custom_call.1} parent=5 // pred_check
        %p476 = pneg %p475
      $region54: #{tpu_custom_call.1} parent=5 // pred_check_branch
        %478 = sbr.rel (%p476) target = $region56
      $region55: #{tpu_custom_call.1} parent=5 // pred_region
        // Predicated region
        $region57: #{tpu_custom_call.1} parent=55 // pred_check
          %p479 = pneg %p74
        $region58: #{tpu_custom_call.1} parent=55 // pred_check_branch
          %481 = sbr.rel (%p479) target = $region60
        $region59: #{tpu_custom_call.1} parent=55 // pred_region
          %s482 = sand.u32 %s64, 1
          %s483 = scalar_lea.sflag [#allocation7], %s482
          %s484 = sand.u32 %s64, 1
          %s485 = smul.addr %s484, 8
          %s486 = scalar_lea.vmem [#allocation6], %s485
          %s488 = ssub.s32 128, 128
          %489 = vsyncadd %s483, %s488
          %s490 = smul.addr %s40, 2
          %s491 = sadd.s32 %s41, %s490
          %s492 = smul.addr %s491, 128
          %s493 = scalar_lea.hbm %s0, %s492
          %s495 = sshll.u32 %s486, 4
          %s496 = int_to_ptr.vmem [resolvable:$true] %s495
          %498 = dma.hbm_to_vmem [thread:$0]  %s493, 128, %s496, %s483
        $region60: #{tpu_custom_call.1} parent=55 // pred_fallthru
          _
        // Predicated region
        $region61: #{tpu_custom_call.1} parent=55 // pred_check
          %p499 = pneg %p102
        $region62: #{tpu_custom_call.1} parent=55 // pred_check_branch
          %501 = sbr.rel (%p499) target = $region64
        $region63: #{tpu_custom_call.1} parent=55 // pred_region
          %s502 = sand.u32 %s33, 1
          %s503 = scalar_lea.sflag [#allocation10], %s502
          %s504 = sand.u32 %s92, 1
          %s505 = smul.addr %s504, 8
          %s506 = scalar_lea.vmem [#allocation9], %s505
          %s508 = ssub.s32 128, 128
          %509 = vsyncadd %s503, %s508
          %s510 = smul.addr %s40, 2
          %s511 = sadd.s32 %s41, %s510
          %s512 = smul.addr %s511, 128
          %s513 = scalar_lea.hbm %s1, %s512
          %s515 = sshll.u32 %s506, 4
          %s516 = int_to_ptr.vmem [resolvable:$true] %s515
          %518 = dma.hbm_to_vmem [thread:$0]  %s513, 128, %s516, %s503
        $region64: #{tpu_custom_call.1} parent=55 // pred_fallthru
          _
        // Predicated region
        $region65: #{tpu_custom_call.1} parent=55 // pred_check
          %p519 = pneg %p130
        $region66: #{tpu_custom_call.1} parent=55 // pred_check_branch
          %521 = sbr.rel (%p519) target = $region68
        $region67: #{tpu_custom_call.1} parent=55 // pred_region
          %s522 = sand.u32 %s33, 1
          %s523 = scalar_lea.sflag [#allocation10], %s522
          %s524 = sand.u32 %s120, 1
          %s525 = smul.addr %s524, 16
          %s526 = scalar_lea.vmem [#allocation11], %s525
          %s527 = smul.u32 2, %s42
          %s529 = ssub.s32 256, 256
          %530 = vsyncadd %s523, %s529
          %s531 = smul.addr %s40, 4
          %s532 = sadd.s32 %s527, %s531
          %s533 = smul.addr %s532, 128
          %s534 = scalar_lea.hbm %s2, %s533
          %s535 = sshll.u32 %s526, 4
          %s536 = int_to_ptr.vmem [resolvable:$true] %s535
          %541 = dma.hbm_to_vmem [thread:$0]  %s534, 256, %s536, %s523, 128, 128, 8
        $region68: #{tpu_custom_call.1} parent=55 // pred_fallthru
          _
        // Predicated region
        $region69: #{tpu_custom_call.1} parent=55 // pred_check
          %p542 = pneg %p158
        $region70: #{tpu_custom_call.1} parent=55 // pred_check_branch
          %544 = sbr.rel (%p542) target = $region72
        $region71: #{tpu_custom_call.1} parent=55 // pred_region
          %s545 = sand.u32 %s33, 1
          %s546 = scalar_lea.sflag [#allocation13], %s545
          %s547 = sand.u32 %s148, 1
          %s548 = smul.addr %s547, 16
          %s549 = scalar_lea.vmem [#allocation12], %s548
          %s550 = smul.u32 2, %s42
          %s552 = ssub.s32 256, 256
          %553 = vsyncadd %s546, %s552
          %s554 = smul.addr %s40, 4
          %s555 = sadd.s32 %s550, %s554
          %s556 = smul.addr %s555, 128
          %s557 = scalar_lea.hbm %s3, %s556
          %s558 = sshll.u32 %s549, 4
          %s559 = int_to_ptr.vmem [resolvable:$true] %s558
          %564 = dma.hbm_to_vmem [thread:$0]  %s557, 256, %s559, %s546, 128, 128, 8
        $region72: #{tpu_custom_call.1} parent=55 // pred_fallthru
          _
      $region56: #{tpu_custom_call.1} parent=5 // pred_fallthru
        _
      %p565 = scmp.le.s32.totalorder 1, %s33
      %p566 = scmp.lt.s32.totalorder %s33, 9
      %p567 = pnand %p565, %p566
      %p568 = pneg %p567
      // Predicated region
      $region73: #{tpu_custom_call.1} parent=5 // pred_check
        _
      $region74: #{tpu_custom_call.1} parent=5 // pred_check_branch
        %570 = sbr.rel (%p567) target = $region76
      $region75: #{tpu_custom_call.1} parent=5 // pred_region
        %s571 = ssub.s32 %s33, 1
        %s572 = sand.u32 %s67, 1
        %s573 = scalar_lea.sflag [#allocation7], %s572
        %s574 = sand.u32 %s67, 1
        %s575 = smul.addr %s574, 8
        %s576 = scalar_lea.vmem [#allocation6], %s575
        // Predicated region
        $region77: #{tpu_custom_call.1} parent=75 // pred_check
          %p577 = pneg %p80
        $region78: #{tpu_custom_call.1} parent=75 // pred_check_branch
          %579 = sbr.rel (%p577) target = $region80
        $region79: #{tpu_custom_call.1} parent=75 // pred_region
          %580 = dma.done %s573, 128
        $region80: #{tpu_custom_call.1} parent=75 // pred_fallthru
          _
        %s581 = sand.u32 %s38, 1
        %s582 = scalar_lea.sflag [#allocation10], %s581
        %s583 = sand.u32 %s95, 1
        %s584 = smul.addr %s583, 8
        %s585 = scalar_lea.vmem [#allocation9], %s584
        // Predicated region
        $region81: #{tpu_custom_call.1} parent=75 // pred_check
          %p586 = pneg %p108
        $region82: #{tpu_custom_call.1} parent=75 // pred_check_branch
          %588 = sbr.rel (%p586) target = $region84
        $region83: #{tpu_custom_call.1} parent=75 // pred_region
          %589 = dma.done %s582, 128
        $region84: #{tpu_custom_call.1} parent=75 // pred_fallthru
          _
        %s590 = sand.u32 %s38, 1
        %s591 = scalar_lea.sflag [#allocation10], %s590
        %s592 = sand.u32 %s123, 1
        %s593 = smul.addr %s592, 16
        %s594 = scalar_lea.vmem [#allocation11], %s593
        // Predicated region
        $region85: #{tpu_custom_call.1} parent=75 // pred_check
          %p595 = pneg %p136
        $region86: #{tpu_custom_call.1} parent=75 // pred_check_branch
          %597 = sbr.rel (%p595) target = $region88
        $region87: #{tpu_custom_call.1} parent=75 // pred_region
          %598 = dma.done %s591, 256
        $region88: #{tpu_custom_call.1} parent=75 // pred_fallthru
          _
        %s599 = sand.u32 %s38, 1
        %s600 = scalar_lea.sflag [#allocation13], %s599
        %s601 = sand.u32 %s151, 1
        %s602 = smul.addr %s601, 16
        %s603 = scalar_lea.vmem [#allocation12], %s602
        // Predicated region
        $region89: #{tpu_custom_call.1} parent=75 // pred_check
          %p604 = pneg %p164
        $region90: #{tpu_custom_call.1} parent=75 // pred_check_branch
          %606 = sbr.rel (%p604) target = $region92
        $region91: #{tpu_custom_call.1} parent=75 // pred_region
          %607 = dma.done %s600, 256
        $region92: #{tpu_custom_call.1} parent=75 // pred_fallthru
          _
        // Predicated region
        $region93: #{tpu_custom_call.1} parent=75 // pred_check
          %p608 = pneg %p185
        $region94: #{tpu_custom_call.1} parent=75 // pred_check_branch
          %610 = sbr.rel (%p608) target = $region96
        $region95: #{tpu_custom_call.1} parent=75 // pred_region
          %611 = dma.done [#allocation13], 256
        $region96: #{tpu_custom_call.1} parent=75 // pred_fallthru
          _
        // Predicated region
        $region97: #{tpu_custom_call.1} parent=75 // pred_check
          %p612 = pneg %p227
        $region98: #{tpu_custom_call.1} parent=75 // pred_check_branch
          %614 = sbr.rel (%p612) target = $region100
        $region99: #{tpu_custom_call.1} parent=75 // pred_region
          %615 = dma.done [#allocation16], 256
        $region100: #{tpu_custom_call.1} parent=75 // pred_fallthru
          _
        // Predicated region
        $region101: #{tpu_custom_call.1} parent=75 // pred_check
          %p616 = pneg %p290
        $region102: #{tpu_custom_call.1} parent=75 // pred_check_branch
          %618 = sbr.rel (%p616) target = $region104
        $region103: #{tpu_custom_call.1} parent=75 // pred_region
          %619 = dma.done [#allocation16], 16
        $region104: #{tpu_custom_call.1} parent=75 // pred_fallthru
          _
        %s620 = sand.u32 %s67, 1
        %s621 = scalar_lea.sflag [#allocation7], %s620
        %s622 = sand.u32 %s67, 1
        %s623 = smul.addr %s622, 8
        %s624 = scalar_lea.vmem [#allocation6], %s623
        %p625 = pneg %p80
        %p626 = pneg %p77
        %s627 = sand.u32 %s38, 1
        %s628 = scalar_lea.sflag [#allocation10], %s627
        %s629 = sand.u32 %s95, 1
        %s630 = smul.addr %s629, 8
        %s631 = scalar_lea.vmem [#allocation9], %s630
        %p632 = pneg %p108
        %p633 = pneg %p105
        %s634 = sand.u32 %s38, 1
        %s635 = scalar_lea.sflag [#allocation10], %s634
        %s636 = sand.u32 %s123, 1
        %s637 = smul.addr %s636, 16
        %s638 = scalar_lea.vmem [#allocation11], %s637
        %p639 = pneg %p136
        %p640 = pneg %p133
        %s641 = sand.u32 %s38, 1
        %s642 = scalar_lea.sflag [#allocation13], %s641
        %s643 = sand.u32 %s151, 1
        %s644 = smul.addr %s643, 16
        %s645 = scalar_lea.vmem [#allocation12], %s644
        %p646 = pneg %p164
        %p647 = pneg %p161
        %p648 = pneg %p185
        %p649 = pneg %p182
        %p650 = pneg %p206
        %p651 = pneg %p203
        %p652 = pneg %p227
        %p653 = pneg %p224
        %p654 = pneg %p248
        %p655 = pneg %p245
        %p656 = pneg %p269
        %p657 = pneg %p266
        %p658 = pneg %p290
        %p659 = pneg %p287
        %p660 = pneg %p311
        %p661 = pneg %p308
        %p662 = pneg %p332
        %p663 = pneg %p329
        %p664 = pneg %p353
        %p665 = pneg %p350
        %p666 = pneg %p374
        %p667 = pneg %p371
        %p668 = pneg %p402
        %p669 = pneg %p399
        %s670 = sand.u32 %s389, 1
        %s671 = scalar_lea.sflag [#allocation8], %s670
        %s672 = sand.u32 %s389, 1
        %s673 = smul.addr %s672, 8
        %s674 = scalar_lea.vmem [#allocation18], %s673
        %s675 = smul.u32 2, %s45
        %s676 = smul.u32 2, %s45
        %p678 = scmp.eq.s32.totalorder %s45, 0
        // Predicated region
        $region105: #{tpu_custom_call.1} parent=75 // pred_check
          %p679 = pneg %p678
        $region106: #{tpu_custom_call.1} parent=75 // pred_check_branch
          %681 = sbr.rel (%p679) target = $region108
        $region107: #{tpu_custom_call.1} parent=75 // pred_region
          %v682 = vld [vmem:[%s576] sm:$0xff]
          %v683 = vld [vmem:[%s585] sm:$0xff]
          %v684 = vadd.f32 %v682, %v683
          %v685 = vpack.c.bf16 %v684, %v684
          %v686 = vld [vmem:[#allocation14] sm:$0xf]
          %v687 = vld [vmem:[#allocation14 + $0x4] sm:$0xf]
          %v688 = vld [vmem:[#allocation14 + $0x8] sm:$0xf]
          %v689 = vld [vmem:[#allocation14 + $0xc] sm:$0xf]
          %v690 = vld [vmem:[%s7] sm:$0x1]
          %v692 = vlaneseq
          %v693 = vshrl.u32 %v692, 7
          %v694 = vsub.s32 0, %v693
          %v695 = vrot.slane %v690, %v694
          %v701 = vunpack.c.l.b16 %v686
          %v702 = vunpack.c.l.b16 %v687
          %v703 = vunpack.c.l.b16 %v688
          %v704 = vunpack.c.l.b16 %v689
          %v705 = vpack.c.b16 %v702, %v701
          %v706 = vpack.c.b16 %v704, %v703
          %vm709 = vcmask 261120
          %v711 = vsel %vm709, %v685, 0
          %713 = vmatprep.subr.bf16.mxu0 0
          %714 = vmatpush1.bf16.msra.mxu0 %v705
          %715 = vmatprep.subr.bf16.mxu0 0
          %716 = vmatpush1.bf16.msra.mxu0 %v706
          %717 = vmatprep.subr.bf16.mxu0 0
          %718 = vmatpush1.bf16.msra.mxu0 0
          %719 = vmatprep.subr.bf16.mxu0 0
          %720 = vmatpush1.bf16.msra.mxu0 0
          %721 = vmatprep.subr.bf16.mxu0 0
          %722 = vmatpush1.bf16.msra.mxu0 0
          %723 = vmatprep.subr.bf16.mxu0 0
          %724 = vmatpush1.bf16.msra.mxu0 0
          %725 = vmatprep.subr.bf16.mxu0 0
          %726 = vmatpush1.bf16.msra.mxu0 0
          %727 = vmatprep.subr.bf16.mxu0 0
          %728 = vmatpush1.bf16.msra.mxu0 0
          %729 = vmatprep.subr.bf16.mxu0 0
          %730 = vmatpush1.bf16.msra.mxu0 0
          %731 = vmatprep.subr.bf16.mxu0 0
          %732 = vmatpush1.bf16.msra.mxu0 0
          %733 = vmatprep.subr.bf16.mxu0 0
          %734 = vmatpush1.bf16.msra.mxu0 0
          %735 = vmatprep.subr.bf16.mxu0 0
          %736 = vmatpush1.bf16.msra.mxu0 0
          %737 = vmatprep.subr.bf16.mxu0 0
          %738 = vmatpush1.bf16.msra.mxu0 0
          %739 = vmatprep.subr.bf16.mxu0 0
          %740 = vmatpush1.bf16.msra.mxu0 0
          %741 = vmatprep.subr.bf16.mxu0 0
          %742 = vmatpush1.bf16.msra.mxu0 0
          %743 = vmatprep.subr.bf16.mxu0 0
          %744 = vmatpush1.bf16.msra.mxu0 0
          %745 = vmatprep.mubr.bf16.mxu0 0
          %746 = vmatmul.mubr.bf16.gmra.mrb[0].mxu0 %v711
          %v747 = vpop.f32.mrb[0].mxu0
          %v748 = vadd.f32 %v695, %v747
          %v749 = vpop.f32.mrb[0].mxu0
          %v750 = vpop.f32.mrb[0].mxu0
          %v751 = vpop.f32.mrb[0].mxu0
          %752 = vdwg.mxu0
          %v753 = vpack.c.bf16 %v748, %v748
          %755 = vrot.lane.b32.xlu0 %v753, 120
          %v756 = vpop.permute.xlu0 %755
          %758 = vrot.lane.b32.xlu0 %v753, 112
          %v759 = vpop.permute.xlu0 %758
          %761 = vrot.lane.b32.xlu0 %v753, 104
          %v762 = vpop.permute.xlu0 %761
          %vm764 = vcmask 60416
          %765 = vst.msk [vmem:[#allocation2] sm:$0xf] %vm764, %v753
          %766 = vst.msk [vmem:[#allocation2 + $0x4] sm:$0xf] %vm764, %v756
          %767 = vst.msk [vmem:[#allocation2 + $0x8] sm:$0xf] %vm764, %v759
          %768 = vst.msk [vmem:[#allocation2 + $0xc] sm:$0xf] %vm764, %v762
          %vm769 = vcmask 7168
          %770 = vst.msk [vmem:[#allocation3] sm:$0xff] %vm769, -inf
          %771 = vst.msk [vmem:[#allocation3 + $0x8] sm:$0xff] %vm769, -inf
          %772 = vst.msk [vmem:[#allocation3 + $0x10] sm:$0xff] %vm769, -inf
          %773 = vst.msk [vmem:[#allocation3 + $0x18] sm:$0xff] %vm769, -inf
          %774 = vst.msk [vmem:[#allocation4] sm:$0xff] %vm769, 0.0
          %775 = vst.msk [vmem:[#allocation4 + $0x8] sm:$0xff] %vm769, 0.0
          %776 = vst.msk [vmem:[#allocation4 + $0x10] sm:$0xff] %vm769, 0.0
          %777 = vst.msk [vmem:[#allocation4 + $0x18] sm:$0xff] %vm769, 0.0
          %vm778 = vcmask 64512
          %779 = vst.msk [vmem:[#allocation5] sm:$0xff] %vm778, 0.0
          %780 = vst.msk [vmem:[#allocation5 + $0x8] sm:$0xff] %vm778, 0.0
          %781 = vst.msk [vmem:[#allocation5 + $0x10] sm:$0xff] %vm778, 0.0
          %782 = vst.msk [vmem:[#allocation5 + $0x18] sm:$0xff] %vm778, 0.0
        $region108: #{tpu_custom_call.1} parent=75 // pred_fallthru
          _
        %v783 = vld [vmem:[%s594] sm:$0xff]
        %v784 = vld [vmem:[%s594 + $0x8] sm:$0xff]
        %v785 = vld [vmem:[%s603] sm:$0xff]
        %v786 = vld [vmem:[%s603 + $0x8] sm:$0xff]
        %v787 = vadd.f32 %v783, %v785
        %v788 = vadd.f32 %v784, %v786
        %v789 = vpack.c.bf16 %v788, %v787
        %v790 = vld [vmem:[%s5] sm:$0xf]
        %v791 = vld [vmem:[%s5 + $0x4] sm:$0xf]
        %v792 = vld [vmem:[%s5 + $0x8] sm:$0xf]
        %v793 = vld [vmem:[%s5 + $0xc] sm:$0xf]
        %v794 = vld [vmem:[%s8] sm:$0x1]
        %v796 = vlaneseq
        %v797 = vshrl.u32 %v796, 7
        %v798 = vsub.s32 0, %v797
        %v799 = vrot.slane %v794, %v798
        %v805 = vunpack.c.l.b16 %v790
        %v806 = vunpack.c.l.b16 %v791
        %v807 = vunpack.c.l.b16 %v792
        %v808 = vunpack.c.l.b16 %v793
        %v809 = vpack.c.b16 %v806, %v805
        %v810 = vpack.c.b16 %v808, %v807
        %vm813 = vcmask 261120
        %v815 = vsel %vm813, %v789, 0
        %817 = vmatprep.subr.bf16.mxu0 0
        %818 = vmatpush1.bf16.msra.mxu0 %v809
        %819 = vmatprep.subr.bf16.mxu0 0
        %820 = vmatpush1.bf16.msra.mxu0 %v810
        %821 = vmatprep.subr.bf16.mxu0 0
        %822 = vmatpush1.bf16.msra.mxu0 0
        %823 = vmatprep.subr.bf16.mxu0 0
        %824 = vmatpush1.bf16.msra.mxu0 0
        %825 = vmatprep.subr.bf16.mxu0 0
        %826 = vmatpush1.bf16.msra.mxu0 0
        %827 = vmatprep.subr.bf16.mxu0 0
        %828 = vmatpush1.bf16.msra.mxu0 0
        %829 = vmatprep.subr.bf16.mxu0 0
        %830 = vmatpush1.bf16.msra.mxu0 0
        %831 = vmatprep.subr.bf16.mxu0 0
        %832 = vmatpush1.bf16.msra.mxu0 0
        %833 = vmatprep.subr.bf16.mxu0 0
        %834 = vmatpush1.bf16.msra.mxu0 0
        %835 = vmatprep.subr.bf16.mxu0 0
        %836 = vmatpush1.bf16.msra.mxu0 0
        %837 = vmatprep.subr.bf16.mxu0 0
        %838 = vmatpush1.bf16.msra.mxu0 0
        %839 = vmatprep.subr.bf16.mxu0 0
        %840 = vmatpush1.bf16.msra.mxu0 0
        %841 = vmatprep.subr.bf16.mxu0 0
        %842 = vmatpush1.bf16.msra.mxu0 0
        %843 = vmatprep.subr.bf16.mxu0 0
        %844 = vmatpush1.bf16.msra.mxu0 0
        %845 = vmatprep.subr.bf16.mxu0 0
        %846 = vmatpush1.bf16.msra.mxu0 0
        %847 = vmatprep.subr.bf16.mxu0 0
        %848 = vmatpush1.bf16.msra.mxu0 0
        %849 = vmatprep.mubr.bf16.mxu0 0
        %850 = vmatmul.mubr.bf16.gmra.mrb[0].mxu0 %v815
        %v851 = vpop.f32.mrb[0].mxu0
        %v852 = vadd.f32 %v799, %v851
        %v853 = vpop.f32.mrb[0].mxu0
        %v854 = vpop.f32.mrb[0].mxu0
        %v855 = vadd.f32 %v799, %v854
        %v856 = vpop.f32.mrb[0].mxu0
        %857 = vdwg.mxu0
        %v858 = vpack.c.bf16 %v784, %v783
        %v859 = vld [vmem:[#allocation15] sm:$0xf]
        %v860 = vld [vmem:[#allocation15 + $0x4] sm:$0xf]
        %v861 = vld [vmem:[#allocation15 + $0x8] sm:$0xf]
        %v862 = vld [vmem:[#allocation15 + $0xc] sm:$0xf]
        %v863 = vld [vmem:[#allocation17] sm:$0x1]
        %v865 = vlaneseq
        %v866 = vshrl.u32 %v865, 7
        %v867 = vsub.s32 0, %v866
        %v868 = vrot.slane %v863, %v867
        %v874 = vunpack.c.l.b16 %v859
        %v875 = vunpack.c.l.b16 %v860
        %v876 = vunpack.c.l.b16 %v861
        %v877 = vunpack.c.l.b16 %v862
        %v878 = vpack.c.b16 %v875, %v874
        %v879 = vpack.c.b16 %v877, %v876
        %v883 = vsel %vm813, %v858, 0
        %885 = vmatprep.subr.bf16.mxu0 0
        %886 = vmatpush1.bf16.msra.mxu0 %v878
        %887 = vmatprep.subr.bf16.mxu0 0
        %888 = vmatpush1.bf16.msra.mxu0 %v879
        %889 = vmatprep.subr.bf16.mxu0 0
        %890 = vmatpush1.bf16.msra.mxu0 0
        %891 = vmatprep.subr.bf16.mxu0 0
        %892 = vmatpush1.bf16.msra.mxu0 0
        %893 = vmatprep.subr.bf16.mxu0 0
        %894 = vmatpush1.bf16.msra.mxu0 0
        %895 = vmatprep.subr.bf16.mxu0 0
        %896 = vmatpush1.bf16.msra.mxu0 0
        %897 = vmatprep.subr.bf16.mxu0 0
        %898 = vmatpush1.bf16.msra.mxu0 0
        %899 = vmatprep.subr.bf16.mxu0 0
        %900 = vmatpush1.bf16.msra.mxu0 0
        %901 = vmatprep.subr.bf16.mxu0 0
        %902 = vmatpush1.bf16.msra.mxu0 0
        %903 = vmatprep.subr.bf16.mxu0 0
        %904 = vmatpush1.bf16.msra.mxu0 0
        %905 = vmatprep.subr.bf16.mxu0 0
        %906 = vmatpush1.bf16.msra.mxu0 0
        %907 = vmatprep.subr.bf16.mxu0 0
        %908 = vmatpush1.bf16.msra.mxu0 0
        %909 = vmatprep.subr.bf16.mxu0 0
        %910 = vmatpush1.bf16.msra.mxu0 0
        %911 = vmatprep.subr.bf16.mxu0 0
        %912 = vmatpush1.bf16.msra.mxu0 0
        %913 = vmatprep.subr.bf16.mxu0 0
        %914 = vmatpush1.bf16.msra.mxu0 0
        %915 = vmatprep.subr.bf16.mxu0 0
        %916 = vmatpush1.bf16.msra.mxu0 0
        %917 = vmatprep.mubr.bf16.mxu0 0
        %918 = vmatmul.mubr.bf16.gmra.mrb[0].mxu0 %v883
        %v919 = vpop.f32.mrb[0].mxu0
        %v920 = vadd.f32 %v868, %v919
        %v921 = vpop.f32.mrb[0].mxu0
        %v922 = vpop.f32.mrb[0].mxu0
        %v923 = vadd.f32 %v868, %v922
        %v924 = vpop.f32.mrb[0].mxu0
        %925 = vdwg.mxu0
        %v926 = vpack.c.bf16 %v855, %v852
        %928 = vrot.lane.b32.xlu0 %v926, 120
        %v929 = vpop.permute.xlu0 %928
        %930 = vrot.lane.b32.xlu0 %v926, 112
        %v931 = vpop.permute.xlu0 %930
        %932 = vrot.lane.b32.xlu0 %v926, 104
        %v933 = vpop.permute.xlu0 %932
        %v934 = vpack.c.bf16 %v923, %v920
        %936 = vrot.lane.b32.xlu0 %v934, 120
        %v937 = vpop.permute.xlu0 %936
        %939 = vrot.lane.b32.xlu0 %v934, 112
        %v940 = vpop.permute.xlu0 %939
        %942 = vrot.lane.b32.xlu0 %v934, 104
        %v943 = vpop.permute.xlu0 %942
        %v945 = vld [vmem:[#allocation2] sm:$0xf]
        %v946 = vld [vmem:[#allocation2 + $0x4] sm:$0xf]
        %v947 = vld [vmem:[#allocation2 + $0x8] sm:$0xf]
        %v948 = vld [vmem:[#allocation2 + $0xc] sm:$0xf]
        %vm949 = vcmask 64512
        %v951 = vsel %vm949, %v945, 0
        %v954 = vsel %vm949, %v926, 0
        %956 = vmatprep.subr.bf16.mxu0 0
        %957 = vmatpush1.bf16.xpose.msra.mxu0 %v954
        %958 = vmatprep.subr.bf16.mxu0 0
        %959 = vmatpush1.bf16.xpose.msra.mxu0 0
        %960 = vmatprep.subr.bf16.mxu0 0
        %961 = vmatpush1.bf16.xpose.msra.mxu0 0
        %962 = vmatprep.subr.bf16.mxu0 0
        %963 = vmatpush1.bf16.xpose.msra.mxu0 0
        %964 = vmatprep.subr.bf16.mxu0 0
        %965 = vmatpush1.bf16.xpose.msra.mxu0 0
        %966 = vmatprep.subr.bf16.mxu0 0
        %967 = vmatpush1.bf16.xpose.msra.mxu0 0
        %968 = vmatprep.subr.bf16.mxu0 0
        %969 = vmatpush1.bf16.xpose.msra.mxu0 0
        %970 = vmatprep.subr.bf16.mxu0 0
        %971 = vmatpush1.bf16.xpose.msra.mxu0 0
        %972 = vmatprep.subr.bf16.mxu0 0
        %973 = vmatpush1.bf16.xpose.msra.mxu0 0
        %974 = vmatprep.subr.bf16.mxu0 0
        %975 = vmatpush1.bf16.xpose.msra.mxu0 0
        %976 = vmatprep.subr.bf16.mxu0 0
        %977 = vmatpush1.bf16.xpose.msra.mxu0 0
        %978 = vmatprep.subr.bf16.mxu0 0
        %979 = vmatpush1.bf16.xpose.msra.mxu0 0
        %980 = vmatprep.subr.bf16.mxu0 0
        %981 = vmatpush1.bf16.xpose.msra.mxu0 0
        %982 = vmatprep.subr.bf16.mxu0 0
        %983 = vmatpush1.bf16.xpose.msra.mxu0 0
        %984 = vmatprep.subr.bf16.mxu0 0
        %985 = vmatpush1.bf16.xpose.msra.mxu0 0
        %986 = vmatprep.subr.bf16.mxu0 0
        %987 = vmatpush1.bf16.xpose.msra.mxu0 0
        %988 = vmatprep.mubr.bf16.mxu0 0
        %989 = vmatmul.mubr.bf16.gmra.mrb[0].mxu0 %v951
        %v990 = vpop.f32.mrb[0].mxu0
        %v991 = vadd.f32 0.0, %v990
        %v992 = vpop.f32.mrb[0].mxu0
        %v993 = vpop.f32.mrb[0].mxu0
        %v994 = vpop.f32.mrb[0].mxu0
        %995 = vdwg.mxu0
        %v997 = vsel %vm949, %v946, 0
        %v1000 = vsel %vm949, %v929, 0
        %1002 = vmatprep.subr.bf16.mxu0 0
        %1003 = vmatpush1.bf16.xpose.msra.mxu0 %v1000
        %1004 = vmatprep.subr.bf16.mxu0 0
        %1005 = vmatpush1.bf16.xpose.msra.mxu0 0
        %1006 = vmatprep.subr.bf16.mxu0 0
        %1007 = vmatpush1.bf16.xpose.msra.mxu0 0
        %1008 = vmatprep.subr.bf16.mxu0 0
        %1009 = vmatpush1.bf16.xpose.msra.mxu0 0
        %1010 = vmatprep.subr.bf16.mxu0 0
        %1011 = vmatpush1.bf16.xpose.msra.mxu0 0
        %1012 = vmatprep.subr.bf16.mxu0 0
        %1013 = vmatpush1.bf16.xpose.msra.mxu0 0
        %1014 = vmatprep.subr.bf16.mxu0 0
        %1015 = vmatpush1.bf16.xpose.msra.mxu0 0
        %1016 = vmatprep.subr.bf16.mxu0 0
        %1017 = vmatpush1.bf16.xpose.msra.mxu0 0
        %1018 = vmatprep.subr.bf16.mxu0 0
        %1019 = vmatpush1.bf16.xpose.msra.mxu0 0
        %1020 = vmatprep.subr.bf16.mxu0 0
        %1021 = vmatpush1.bf16.xpose.msra.mxu0 0
        %1022 = vmatprep.subr.bf16.mxu0 0
        %1023 = vmatpush1.bf16.xpose.msra.mxu0 0
        %1024 = vmatprep.subr.bf16.mxu0 0
        %1025 = vmatpush1.bf16.xpose.msra.mxu0 0
        %1026 = vmatprep.subr.bf16.mxu0 0
        %1027 = vmatpush1.bf16.xpose.msra.mxu0 0
        %1028 = vmatprep.subr.bf16.mxu0 0
        %1029 = vmatpush1.bf16.xpose.msra.mxu0 0
        %1030 = vmatprep.subr.bf16.mxu0 0
        %1031 = vmatpush1.bf16.xpose.msra.mxu0 0
        %1032 = vmatprep.subr.bf16.mxu0 0
        %1033 = vmatpush1.bf16.xpose.msra.mxu0 0
        %1034 = vmatprep.mubr.bf16.mxu0 0
        %1035 = vmatmul.mubr.bf16.gmra.mrb[0].mxu0 %v997
        %v1036 = vpop.f32.mrb[0].mxu0
        %v1037 = vadd.f32 0.0, %v1036
        %v1038 = vpop.f32.mrb[0].mxu0
        %v1039 = vpop.f32.mrb[0].mxu0
        %v1040 = vpop.f32.mrb[0].mxu0
        %1041 = vdwg.mxu0
        %v1043 = vsel %vm949, %v947, 0
        %v1046 = vsel %vm949, %v931, 0
        %1048 = vmatprep.subr.bf16.mxu0 0
        %1049 = vmatpush1.bf16.xpose.msra.mxu0 %v1046
        %1050 = vmatprep.subr.bf16.mxu0 0
        %1051 = vmatpush1.bf16.xpose.msra.mxu0 0
        %1052 = vmatprep.subr.bf16.mxu0 0
        %1053 = vmatpush1.bf16.xpose.msra.mxu0 0
        %1054 = vmatprep.subr.bf16.mxu0 0
        %1055 = vmatpush1.bf16.xpose.msra.mxu0 0
        %1056 = vmatprep.subr.bf16.mxu0 0
        %1057 = vmatpush1.bf16.xpose.msra.mxu0 0
        %1058 = vmatprep.subr.bf16.mxu0 0
        %1059 = vmatpush1.bf16.xpose.msra.mxu0 0
        %1060 = vmatprep.subr.bf16.mxu0 0
        %1061 = vmatpush1.bf16.xpose.msra.mxu0 0
        %1062 = vmatprep.subr.bf16.mxu0 0
        %1063 = vmatpush1.bf16.xpose.msra.mxu0 0
        %1064 = vmatprep.subr.bf16.mxu0 0
        %1065 = vmatpush1.bf16.xpose.msra.mxu0 0
        %1066 = vmatprep.subr.bf16.mxu0 0
        %1067 = vmatpush1.bf16.xpose.msra.mxu0 0
        %1068 = vmatprep.subr.bf16.mxu0 0
        %1069 = vmatpush1.bf16.xpose.msra.mxu0 0
        %1070 = vmatprep.subr.bf16.mxu0 0
        %1071 = vmatpush1.bf16.xpose.msra.mxu0 0
        %1072 = vmatprep.subr.bf16.mxu0 0
        %1073 = vmatpush1.bf16.xpose.msra.mxu0 0
        %1074 = vmatprep.subr.bf16.mxu0 0
        %1075 = vmatpush1.bf16.xpose.msra.mxu0 0
        %1076 = vmatprep.subr.bf16.mxu0 0
        %1077 = vmatpush1.bf16.xpose.msra.mxu0 0
        %1078 = vmatprep.subr.bf16.mxu0 0
        %1079 = vmatpush1.bf16.xpose.msra.mxu0 0
        %1080 = vmatprep.mubr.bf16.mxu0 0
        %1081 = vmatmul.mubr.bf16.gmra.mrb[0].mxu0 %v1043
        %v1082 = vpop.f32.mrb[0].mxu0
        %v1083 = vadd.f32 0.0, %v1082
        %v1084 = vpop.f32.mrb[0].mxu0
        %v1085 = vpop.f32.mrb[0].mxu0
        %v1086 = vpop.f32.mrb[0].mxu0
        %1087 = vdwg.mxu0
        %v1089 = vsel %vm949, %v948, 0
        %v1092 = vsel %vm949, %v933, 0
        %1094 = vmatprep.subr.bf16.mxu0 0
        %1095 = vmatpush1.bf16.xpose.msra.mxu0 %v1092
        %1096 = vmatprep.subr.bf16.mxu0 0
        %1097 = vmatpush1.bf16.xpose.msra.mxu0 0
        %1098 = vmatprep.subr.bf16.mxu0 0
        %1099 = vmatpush1.bf16.xpose.msra.mxu0 0
        %1100 = vmatprep.subr.bf16.mxu0 0
        %1101 = vmatpush1.bf16.xpose.msra.mxu0 0
        %1102 = vmatprep.subr.bf16.mxu0 0
        %1103 = vmatpush1.bf16.xpose.msra.mxu0 0
        %1104 = vmatprep.subr.bf16.mxu0 0
        %1105 = vmatpush1.bf16.xpose.msra.mxu0 0
        %1106 = vmatprep.subr.bf16.mxu0 0
        %1107 = vmatpush1.bf16.xpose.msra.mxu0 0
        %1108 = vmatprep.subr.bf16.mxu0 0
        %1109 = vmatpush1.bf16.xpose.msra.mxu0 0
        %1110 = vmatprep.subr.bf16.mxu0 0
        %1111 = vmatpush1.bf16.xpose.msra.mxu0 0
        %1112 = vmatprep.subr.bf16.mxu0 0
        %1113 = vmatpush1.bf16.xpose.msra.mxu0 0
        %1114 = vmatprep.subr.bf16.mxu0 0
        %1115 = vmatpush1.bf16.xpose.msra.mxu0 0
        %1116 = vmatprep.subr.bf16.mxu0 0
        %1117 = vmatpush1.bf16.xpose.msra.mxu0 0
        %1118 = vmatprep.subr.bf16.mxu0 0
        %1119 = vmatpush1.bf16.xpose.msra.mxu0 0
        %1120 = vmatprep.subr.bf16.mxu0 0
        %1121 = vmatpush1.bf16.xpose.msra.mxu0 0
        %1122 = vmatprep.subr.bf16.mxu0 0
        %1123 = vmatpush1.bf16.xpose.msra.mxu0 0
        %1124 = vmatprep.subr.bf16.mxu0 0
        %1125 = vmatpush1.bf16.xpose.msra.mxu0 0
        %1126 = vmatprep.mubr.bf16.mxu0 0
        %1127 = vmatmul.mubr.bf16.gmra.mrb[0].mxu0 %v1089
        %v1128 = vpop.f32.mrb[0].mxu0
        %v1129 = vadd.f32 0.0, %v1128
        %v1130 = vpop.f32.mrb[0].mxu0
        %v1131 = vpop.f32.mrb[0].mxu0
        %v1132 = vpop.f32.mrb[0].mxu0
        %1133 = vdwg.mxu0
        %v1134 = vld [vmem:[#allocation3] sm:$0xff]
        %v1135 = vld [vmem:[#allocation3 + $0x8] sm:$0xff]
        %v1136 = vld [vmem:[#allocation3 + $0x10] sm:$0xff]
        %v1137 = vld [vmem:[#allocation3 + $0x18] sm:$0xff]
        %vm1138 = vcmask 130048
        %v1139 = vsel %vm1138, %v991, -inf
        %1140 = vmax.xlane.f32.xlu0 %v1139
        %v1141 = vpop.xlane.xlu0 %1140
        %v1142 = vsel %vm1138, %v1037, -inf
        %1143 = vmax.xlane.f32.xlu0 %v1142
        %v1144 = vpop.xlane.xlu0 %1143
        %v1145 = vsel %vm1138, %v1083, -inf
        %1146 = vmax.xlane.f32.xlu0 %v1145
        %v1147 = vpop.xlane.xlu0 %1146
        %v1148 = vsel %vm1138, %v1129, -inf
        %1149 = vmax.xlane.f32.xlu0 %v1148
        %v1150 = vpop.xlane.xlu0 %1149
        %v1151 = vmax.f32 %v1134, %v1141
        %v1152 = vmax.f32 %v1135, %v1144
        %v1153 = vmax.f32 %v1136, %v1147
        %v1154 = vmax.f32 %v1137, %v1150
        %v1155 = vsub.f32 %v1134, %v1151
        %v1156 = vsub.f32 %v1135, %v1152
        %v1157 = vsub.f32 %v1136, %v1153
        %v1158 = vsub.f32 %v1137, %v1154
        %v1159 = vmul.f32 %v1155, 1.442695
        %v1160 = vpow.pop %v1159
        %v1161 = vmul.f32 %v1156, 1.442695
        %v1162 = vpow.pop %v1161
        %v1163 = vmul.f32 %v1157, 1.442695
        %v1164 = vpow.pop %v1163
        %v1165 = vmul.f32 %v1158, 1.442695
        %v1166 = vpow.pop %v1165
        %1168 = vset.pattern.permute.xlu0 0
        %1169 = vperm.xlu0 %1168, %v1151
        %v1170 = vpop.permute.xlu0 %1169
        %1173 = vset.pattern.permute.xlu0 0
        %1174 = vperm.xlu0 %1173, %v1152
        %v1175 = vpop.permute.xlu0 %1174
        %1178 = vset.pattern.permute.xlu0 0
        %1179 = vperm.xlu0 %1178, %v1153
        %v1180 = vpop.permute.xlu0 %1179
        %1183 = vset.pattern.permute.xlu0 0
        %1184 = vperm.xlu0 %1183, %v1154
        %v1185 = vpop.permute.xlu0 %1184
        %v1187 = vsub.f32 %v991, %v1170
        %v1188 = vsub.f32 %v1037, %v1175
        %v1189 = vsub.f32 %v1083, %v1180
        %v1190 = vsub.f32 %v1129, %v1185
        %v1191 = vmul.f32 %v1187, 1.442695
        %v1192 = vpow.pop %v1191
        %v1193 = vmul.f32 %v1188, 1.442695
        %v1194 = vpow.pop %v1193
        %v1195 = vmul.f32 %v1189, 1.442695
        %v1196 = vpow.pop %v1195
        %v1197 = vmul.f32 %v1190, 1.442695
        %v1198 = vpow.pop %v1197
        %v1199 = vld [vmem:[#allocation4] sm:$0xff]
        %v1200 = vld [vmem:[#allocation4 + $0x8] sm:$0xff]
        %v1201 = vld [vmem:[#allocation4 + $0x10] sm:$0xff]
        %v1202 = vld [vmem:[#allocation4 + $0x18] sm:$0xff]
        %v1203 = vmul.f32 %v1160, %v1199
        %v1204 = vmul.f32 %v1162, %v1200
        %v1205 = vmul.f32 %v1164, %v1201
        %v1206 = vmul.f32 %v1166, %v1202
        %v1207 = vsel %vm1138, %v1192, 0.0
        %1208 = vadd.xlane.f32.xlu0 %v1207
        %v1209 = vpop.xlane.xlu0 %1208
        %v1210 = vsel %vm1138, %v1194, 0.0
        %1211 = vadd.xlane.f32.xlu0 %v1210
        %v1212 = vpop.xlane.xlu0 %1211
        %v1213 = vsel %vm1138, %v1196, 0.0
        %1214 = vadd.xlane.f32.xlu0 %v1213
        %v1215 = vpop.xlane.xlu0 %1214
        %v1216 = vsel %vm1138, %v1198, 0.0
        %1217 = vadd.xlane.f32.xlu0 %v1216
        %v1218 = vpop.xlane.xlu0 %1217
        %v1219 = vadd.f32 %v1203, %v1209
        %v1220 = vadd.f32 %v1204, %v1212
        %v1221 = vadd.f32 %v1205, %v1215
        %v1222 = vadd.f32 %v1206, %v1218
        %vm1223 = vcmask 7168
        %1224 = vst.msk [vmem:[#allocation4] sm:$0xff] %vm1223, %v1219
        %1225 = vst.msk [vmem:[#allocation4 + $0x8] sm:$0xff] %vm1223, %v1220
        %1226 = vst.msk [vmem:[#allocation4 + $0x10] sm:$0xff] %vm1223, %v1221
        %1227 = vst.msk [vmem:[#allocation4 + $0x18] sm:$0xff] %vm1223, %v1222
        %v1228 = vld [vmem:[#allocation5] sm:$0xff]
        %v1229 = vld [vmem:[#allocation5 + $0x8] sm:$0xff]
        %v1230 = vld [vmem:[#allocation5 + $0x10] sm:$0xff]
        %v1231 = vld [vmem:[#allocation5 + $0x18] sm:$0xff]
        %1233 = vset.pattern.permute.xlu0 0
        %1234 = vperm.xlu0 %1233, %v1160
        %v1235 = vpop.permute.xlu0 %1234
        %1238 = vset.pattern.permute.xlu0 0
        %1239 = vperm.xlu0 %1238, %v1162
        %v1240 = vpop.permute.xlu0 %1239
        %1243 = vset.pattern.permute.xlu0 0
        %1244 = vperm.xlu0 %1243, %v1164
        %v1245 = vpop.permute.xlu0 %1244
        %1248 = vset.pattern.permute.xlu0 0
        %1249 = vperm.xlu0 %1248, %v1166
        %v1250 = vpop.permute.xlu0 %1249
        %v1252 = vmul.f32 %v1235, %v1228
        %v1253 = vmul.f32 %v1240, %v1229
        %v1254 = vmul.f32 %v1245, %v1230
        %v1255 = vmul.f32 %v1250, %v1231
        %v1256 = vpack.c.bf16 %v1192, %v1192
        %v1257 = vpack.c.bf16 %v1194, %v1194
        %v1258 = vpack.c.bf16 %v1196, %v1196
        %v1259 = vpack.c.bf16 %v1198, %v1198
        %v1261 = vsel %vm1138, %v1256, 0
        %1263 = vmatprep.subr.bf16.mxu0 0
        %1264 = vmatpush1.bf16.msra.mxu0 %v934
        %1265 = vmatprep.subr.bf16.mxu0 0
        %1266 = vmatpush1.bf16.msra.mxu0 0
        %1267 = vmatprep.subr.bf16.mxu0 0
        %1268 = vmatpush1.bf16.msra.mxu0 0
        %1269 = vmatprep.subr.bf16.mxu0 0
        %1270 = vmatpush1.bf16.msra.mxu0 0
        %1271 = vmatprep.subr.bf16.mxu0 0
        %1272 = vmatpush1.bf16.msra.mxu0 0
        %1273 = vmatprep.subr.bf16.mxu0 0
        %1274 = vmatpush1.bf16.msra.mxu0 0
        %1275 = vmatprep.subr.bf16.mxu0 0
        %1276 = vmatpush1.bf16.msra.mxu0 0
        %1277 = vmatprep.subr.bf16.mxu0 0
        %1278 = vmatpush1.bf16.msra.mxu0 0
        %1279 = vmatprep.subr.bf16.mxu0 0
        %1280 = vmatpush1.bf16.msra.mxu0 0
        %1281 = vmatprep.subr.bf16.mxu0 0
        %1282 = vmatpush1.bf16.msra.mxu0 0
        %1283 = vmatprep.subr.bf16.mxu0 0
        %1284 = vmatpush1.bf16.msra.mxu0 0
        %1285 = vmatprep.subr.bf16.mxu0 0
        %1286 = vmatpush1.bf16.msra.mxu0 0
        %1287 = vmatprep.subr.bf16.mxu0 0
        %1288 = vmatpush1.bf16.msra.mxu0 0
        %1289 = vmatprep.subr.bf16.mxu0 0
        %1290 = vmatpush1.bf16.msra.mxu0 0
        %1291 = vmatprep.subr.bf16.mxu0 0
        %1292 = vmatpush1.bf16.msra.mxu0 0
        %1293 = vmatprep.subr.bf16.mxu0 0
        %1294 = vmatpush1.bf16.msra.mxu0 0
        %1295 = vmatprep.mubr.bf16.mxu0 0
        %1296 = vmatmul.mubr.bf16.gmra.mrb[0].mxu0 %v1261
        %v1297 = vpop.f32.mrb[0].mxu0
        %v1298 = vadd.f32 0.0, %v1297
        %v1299 = vpop.f32.mrb[0].mxu0
        %v1300 = vpop.f32.mrb[0].mxu0
        %v1301 = vpop.f32.mrb[0].mxu0
        %1302 = vdwg.mxu0
        %v1304 = vsel %vm1138, %v1257, 0
        %1306 = vmatprep.subr.bf16.mxu0 0
        %1307 = vmatpush1.bf16.msra.mxu0 %v937
        %1308 = vmatprep.subr.bf16.mxu0 0
        %1309 = vmatpush1.bf16.msra.mxu0 0
        %1310 = vmatprep.subr.bf16.mxu0 0
        %1311 = vmatpush1.bf16.msra.mxu0 0
        %1312 = vmatprep.subr.bf16.mxu0 0
        %1313 = vmatpush1.bf16.msra.mxu0 0
        %1314 = vmatprep.subr.bf16.mxu0 0
        %1315 = vmatpush1.bf16.msra.mxu0 0
        %1316 = vmatprep.subr.bf16.mxu0 0
        %1317 = vmatpush1.bf16.msra.mxu0 0
        %1318 = vmatprep.subr.bf16.mxu0 0
        %1319 = vmatpush1.bf16.msra.mxu0 0
        %1320 = vmatprep.subr.bf16.mxu0 0
        %1321 = vmatpush1.bf16.msra.mxu0 0
        %1322 = vmatprep.subr.bf16.mxu0 0
        %1323 = vmatpush1.bf16.msra.mxu0 0
        %1324 = vmatprep.subr.bf16.mxu0 0
        %1325 = vmatpush1.bf16.msra.mxu0 0
        %1326 = vmatprep.subr.bf16.mxu0 0
        %1327 = vmatpush1.bf16.msra.mxu0 0
        %1328 = vmatprep.subr.bf16.mxu0 0
        %1329 = vmatpush1.bf16.msra.mxu0 0
        %1330 = vmatprep.subr.bf16.mxu0 0
        %1331 = vmatpush1.bf16.msra.mxu0 0
        %1332 = vmatprep.subr.bf16.mxu0 0
        %1333 = vmatpush1.bf16.msra.mxu0 0
        %1334 = vmatprep.subr.bf16.mxu0 0
        %1335 = vmatpush1.bf16.msra.mxu0 0
        %1336 = vmatprep.subr.bf16.mxu0 0
        %1337 = vmatpush1.bf16.msra.mxu0 0
        %1338 = vmatprep.mubr.bf16.mxu0 0
        %1339 = vmatmul.mubr.bf16.gmra.mrb[0].mxu0 %v1304
        %v1340 = vpop.f32.mrb[0].mxu0
        %v1341 = vadd.f32 0.0, %v1340
        %v1342 = vpop.f32.mrb[0].mxu0
        %v1343 = vpop.f32.mrb[0].mxu0
        %v1344 = vpop.f32.mrb[0].mxu0
        %1345 = vdwg.mxu0
        %v1347 = vsel %vm1138, %v1258, 0
        %1349 = vmatprep.subr.bf16.mxu0 0
        %1350 = vmatpush1.bf16.msra.mxu0 %v940
        %1351 = vmatprep.subr.bf16.mxu0 0
        %1352 = vmatpush1.bf16.msra.mxu0 0
        %1353 = vmatprep.subr.bf16.mxu0 0
        %1354 = vmatpush1.bf16.msra.mxu0 0
        %1355 = vmatprep.subr.bf16.mxu0 0
        %1356 = vmatpush1.bf16.msra.mxu0 0
        %1357 = vmatprep.subr.bf16.mxu0 0
        %1358 = vmatpush1.bf16.msra.mxu0 0
        %1359 = vmatprep.subr.bf16.mxu0 0
        %1360 = vmatpush1.bf16.msra.mxu0 0
        %1361 = vmatprep.subr.bf16.mxu0 0
        %1362 = vmatpush1.bf16.msra.mxu0 0
        %1363 = vmatprep.subr.bf16.mxu0 0
        %1364 = vmatpush1.bf16.msra.mxu0 0
        %1365 = vmatprep.subr.bf16.mxu0 0
        %1366 = vmatpush1.bf16.msra.mxu0 0
        %1367 = vmatprep.subr.bf16.mxu0 0
        %1368 = vmatpush1.bf16.msra.mxu0 0
        %1369 = vmatprep.subr.bf16.mxu0 0
        %1370 = vmatpush1.bf16.msra.mxu0 0
        %1371 = vmatprep.subr.bf16.mxu0 0
        %1372 = vmatpush1.bf16.msra.mxu0 0
        %1373 = vmatprep.subr.bf16.mxu0 0
        %1374 = vmatpush1.bf16.msra.mxu0 0
        %1375 = vmatprep.subr.bf16.mxu0 0
        %1376 = vmatpush1.bf16.msra.mxu0 0
        %1377 = vmatprep.subr.bf16.mxu0 0
        %1378 = vmatpush1.bf16.msra.mxu0 0
        %1379 = vmatprep.subr.bf16.mxu0 0
        %1380 = vmatpush1.bf16.msra.mxu0 0
        %1381 = vmatprep.mubr.bf16.mxu0 0
        %1382 = vmatmul.mubr.bf16.gmra.mrb[0].mxu0 %v1347
        %v1383 = vpop.f32.mrb[0].mxu0
        %v1384 = vadd.f32 0.0, %v1383
        %v1385 = vpop.f32.mrb[0].mxu0
        %v1386 = vpop.f32.mrb[0].mxu0
        %v1387 = vpop.f32.mrb[0].mxu0
        %1388 = vdwg.mxu0
        %v1390 = vsel %vm1138, %v1259, 0
        %1392 = vmatprep.subr.bf16.mxu0 0
        %1393 = vmatpush1.bf16.msra.mxu0 %v943
        %1394 = vmatprep.subr.bf16.mxu0 0
        %1395 = vmatpush1.bf16.msra.mxu0 0
        %1396 = vmatprep.subr.bf16.mxu0 0
        %1397 = vmatpush1.bf16.msra.mxu0 0
        %1398 = vmatprep.subr.bf16.mxu0 0
        %1399 = vmatpush1.bf16.msra.mxu0 0
        %1400 = vmatprep.subr.bf16.mxu0 0
        %1401 = vmatpush1.bf16.msra.mxu0 0
        %1402 = vmatprep.subr.bf16.mxu0 0
        %1403 = vmatpush1.bf16.msra.mxu0 0
        %1404 = vmatprep.subr.bf16.mxu0 0
        %1405 = vmatpush1.bf16.msra.mxu0 0
        %1406 = vmatprep.subr.bf16.mxu0 0
        %1407 = vmatpush1.bf16.msra.mxu0 0
        %1408 = vmatprep.subr.bf16.mxu0 0
        %1409 = vmatpush1.bf16.msra.mxu0 0
        %1410 = vmatprep.subr.bf16.mxu0 0
        %1411 = vmatpush1.bf16.msra.mxu0 0
        %1412 = vmatprep.subr.bf16.mxu0 0
        %1413 = vmatpush1.bf16.msra.mxu0 0
        %1414 = vmatprep.subr.bf16.mxu0 0
        %1415 = vmatpush1.bf16.msra.mxu0 0
        %1416 = vmatprep.subr.bf16.mxu0 0
        %1417 = vmatpush1.bf16.msra.mxu0 0
        %1418 = vmatprep.subr.bf16.mxu0 0
        %1419 = vmatpush1.bf16.msra.mxu0 0
        %1420 = vmatprep.subr.bf16.mxu0 0
        %1421 = vmatpush1.bf16.msra.mxu0 0
        %1422 = vmatprep.subr.bf16.mxu0 0
        %1423 = vmatpush1.bf16.msra.mxu0 0
        %1424 = vmatprep.mubr.bf16.mxu0 0
        %1425 = vmatmul.mubr.bf16.gmra.mrb[0].mxu0 %v1390
        %v1426 = vpop.f32.mrb[0].mxu0
        %v1427 = vadd.f32 0.0, %v1426
        %v1428 = vpop.f32.mrb[0].mxu0
        %v1429 = vpop.f32.mrb[0].mxu0
        %v1430 = vpop.f32.mrb[0].mxu0
        %1431 = vdwg.mxu0
        %v1432 = vadd.f32 %v1252, %v1298
        %v1433 = vadd.f32 %v1253, %v1341
        %v1434 = vadd.f32 %v1254, %v1384
        %v1435 = vadd.f32 %v1255, %v1427
        %1436 = vst.msk [vmem:[#allocation5] sm:$0xff] %vm949, %v1432
        %1437 = vst.msk [vmem:[#allocation5 + $0x8] sm:$0xff] %vm949, %v1433
        %1438 = vst.msk [vmem:[#allocation5 + $0x10] sm:$0xff] %vm949, %v1434
        %1439 = vst.msk [vmem:[#allocation5 + $0x18] sm:$0xff] %vm949, %v1435
        %1440 = vst.msk [vmem:[#allocation3] sm:$0xff] %vm1223, %v1151
        %1441 = vst.msk [vmem:[#allocation3 + $0x8] sm:$0xff] %vm1223, %v1152
        %1442 = vst.msk [vmem:[#allocation3 + $0x10] sm:$0xff] %vm1223, %v1153
        %1443 = vst.msk [vmem:[#allocation3 + $0x18] sm:$0xff] %vm1223, %v1154
        %p1444 = scmp.eq.s32.totalorder %s45, 1
        // Predicated region
        $region109: #{tpu_custom_call.1} parent=75 // pred_check
          %p1445 = pneg %p1444
        $region110: #{tpu_custom_call.1} parent=75 // pred_check_branch
          %1447 = sbr.rel (%p1445) target = $region112
        $region111: #{tpu_custom_call.1} parent=75 // pred_region
          %v1448 = vld [vmem:[#allocation5] sm:$0xff]
          %v1449 = vld [vmem:[#allocation5 + $0x8] sm:$0xff]
          %v1450 = vld [vmem:[#allocation5 + $0x10] sm:$0xff]
          %v1451 = vld [vmem:[#allocation5 + $0x18] sm:$0xff]
          %v1452 = vld [vmem:[#allocation4] sm:$0xff]
          %v1453 = vld [vmem:[#allocation4 + $0x8] sm:$0xff]
          %v1454 = vld [vmem:[#allocation4 + $0x10] sm:$0xff]
          %v1455 = vld [vmem:[#allocation4 + $0x18] sm:$0xff]
          %1457 = vset.pattern.permute.xlu0 0
          %1458 = vperm.xlu0 %1457, %v1452
          %v1459 = vpop.permute.xlu0 %1458
          %1462 = vset.pattern.permute.xlu0 0
          %1463 = vperm.xlu0 %1462, %v1453
          %v1464 = vpop.permute.xlu0 %1463
          %1467 = vset.pattern.permute.xlu0 0
          %1468 = vperm.xlu0 %1467, %v1454
          %v1469 = vpop.permute.xlu0 %1468
          %1472 = vset.pattern.permute.xlu0 0
          %1473 = vperm.xlu0 %1472, %v1455
          %v1474 = vpop.permute.xlu0 %1473
          %v1476 = vrcp.pop %v1459
          %v1477 = vmul.f32 %v1448, %v1476
          %v1478 = vrcp.pop %v1464
          %v1479 = vmul.f32 %v1449, %v1478
          %v1480 = vrcp.pop %v1469
          %v1481 = vmul.f32 %v1450, %v1480
          %v1482 = vrcp.pop %v1474
          %v1483 = vmul.f32 %v1451, %v1482
          %v1484 = vpack.c.bf16 %v1477, %v1477
          %v1485 = vpack.c.bf16 %v1479, %v1479
          %v1486 = vpack.c.bf16 %v1481, %v1481
          %v1487 = vpack.c.bf16 %v1483, %v1483
          %1489 = vrot.lane.b32.xlu0 %v1485, 8
          %v1490 = vpop.permute.xlu0 %1489
          %1492 = vrot.lane.b32.xlu0 %v1486, 16
          %v1493 = vpop.permute.xlu0 %1492
          %1495 = vrot.lane.b32.xlu0 %v1487, 24
          %v1496 = vpop.permute.xlu0 %1495
          %v1499 = vsel %vm949, %v1484, %v1490
          %v1501 = vsel %vm1138, %v1499, %v1493
          %vm1502 = vcmask 195584
          %v1504 = vsel %vm1502, %v1501, %v1496
          %v1505 = vld [vmem:[%s10] sm:$0xf]
          %v1506 = vld [vmem:[%s10 + $0x4] sm:$0xf]
          %v1507 = vld [vmem:[%s10 + $0x8] sm:$0xf]
          %v1508 = vld [vmem:[%s10 + $0xc] sm:$0xf]
          %v1509 = vld [vmem:[%s11] sm:$0x1]
          %v1511 = vlaneseq
          %v1512 = vshrl.u32 %v1511, 7
          %v1513 = vsub.s32 0, %v1512
          %v1514 = vrot.slane %v1509, %v1513
          %v1520 = vunpack.c.l.b16 %v1505
          %v1521 = vunpack.c.l.b16 %v1506
          %v1522 = vunpack.c.l.b16 %v1507
          %v1523 = vunpack.c.l.b16 %v1508
          %v1524 = vpack.c.b16 %v1521, %v1520
          %v1525 = vpack.c.b16 %v1523, %v1522
          %v1528 = vsel %vm813, %v1504, 0
          %1530 = vmatprep.subr.bf16.mxu0 0
          %1531 = vmatpush1.bf16.msra.mxu0 %v1524
          %1532 = vmatprep.subr.bf16.mxu0 0
          %1533 = vmatpush1.bf16.msra.mxu0 %v1525
          %1534 = vmatprep.subr.bf16.mxu0 0
          %1535 = vmatpush1.bf16.msra.mxu0 0
          %1536 = vmatprep.subr.bf16.mxu0 0
          %1537 = vmatpush1.bf16.msra.mxu0 0
          %1538 = vmatprep.subr.bf16.mxu0 0
          %1539 = vmatpush1.bf16.msra.mxu0 0
          %1540 = vmatprep.subr.bf16.mxu0 0
          %1541 = vmatpush1.bf16.msra.mxu0 0
          %1542 = vmatprep.subr.bf16.mxu0 0
          %1543 = vmatpush1.bf16.msra.mxu0 0
          %1544 = vmatprep.subr.bf16.mxu0 0
          %1545 = vmatpush1.bf16.msra.mxu0 0
          %1546 = vmatprep.subr.bf16.mxu0 0
          %1547 = vmatpush1.bf16.msra.mxu0 0
          %1548 = vmatprep.subr.bf16.mxu0 0
          %1549 = vmatpush1.bf16.msra.mxu0 0
          %1550 = vmatprep.subr.bf16.mxu0 0
          %1551 = vmatpush1.bf16.msra.mxu0 0
          %1552 = vmatprep.subr.bf16.mxu0 0
          %1553 = vmatpush1.bf16.msra.mxu0 0
          %1554 = vmatprep.subr.bf16.mxu0 0
          %1555 = vmatpush1.bf16.msra.mxu0 0
          %1556 = vmatprep.subr.bf16.mxu0 0
          %1557 = vmatpush1.bf16.msra.mxu0 0
          %1558 = vmatprep.subr.bf16.mxu0 0
          %1559 = vmatpush1.bf16.msra.mxu0 0
          %1560 = vmatprep.subr.bf16.mxu0 0
          %1561 = vmatpush1.bf16.msra.mxu0 0
          %1562 = vmatprep.mubr.bf16.mxu0 0
          %1563 = vmatmul.mubr.bf16.gmra.mrb[0].mxu0 %v1528
          %v1564 = vpop.f32.mrb[0].mxu0
          %v1565 = vadd.f32 %v1514, %v1564
          %v1566 = vpop.f32.mrb[0].mxu0
          %v1567 = vpop.f32.mrb[0].mxu0
          %v1568 = vpop.f32.mrb[0].mxu0
          %1569 = vdwg.mxu0
          %v1570 = vld [vmem:[%s576] sm:$0xff]
          %v1571 = vadd.f32 %v1570, %v1565
          %v1572 = vsel %vm813, %v1571, 0.0
          %1573 = vadd.xlane.f32.xlu0 %v1572
          %v1574 = vpop.xlane.xlu0 %1573
          %v1575 = vrcp.pop 32.0
          %v1576 = vmul.f32 %v1574, %v1575
          %v1577 = vsub.f32 %v1571, %v1576
          %v1578 = vmul.f32 %v1577, %v1577
          %v1579 = vsel %vm813, %v1578, 0.0
          %1580 = vadd.xlane.f32.xlu0 %v1579
          %v1581 = vpop.xlane.xlu0 %1580
          %v1582 = vmul.f32 %v1581, %v1575
          %v1583 = vadd.f32 %v1582, 1e-05
          %v1584 = vrsqrt.pop %v1583
          %v1585 = vmul.f32 %v1577, %v1584
          %v1586 = vld [vmem:[%s12] sm:$0x1]
          %v1588 = vlaneseq
          %v1589 = vshrl.u32 %v1588, 7
          %v1590 = vsub.s32 0, %v1589
          %v1591 = vrot.slane %v1586, %v1590
          %v1593 = vmul.f32 %v1585, %v1591
          %v1594 = vld [vmem:[%s13] sm:$0x1]
          %v1596 = vlaneseq
          %v1597 = vshrl.u32 %v1596, 7
          %v1598 = vsub.s32 0, %v1597
          %v1599 = vrot.slane %v1594, %v1598
          %v1601 = vadd.f32 %v1593, %v1599
          %1602 = vst.msk [vmem:[%s674] sm:$0xff] %vm813, %v1601
        $region112: #{tpu_custom_call.1} parent=75 // pred_fallthru
          _
        %s1603 = sand.u32 %s389, 1
        %s1604 = scalar_lea.sflag [#allocation8], %s1603
        %s1605 = sand.u32 %s389, 1
        %s1606 = smul.addr %s1605, 8
        %s1607 = scalar_lea.vmem [#allocation18], %s1606
        // Predicated region
        $region113: #{tpu_custom_call.1} parent=75 // pred_check
          %p1608 = pneg %p399
        $region114: #{tpu_custom_call.1} parent=75 // pred_check_branch
          %1610 = sbr.rel (%p1608) target = $region116
        $region115: #{tpu_custom_call.1} parent=75 // pred_region
          %s1612 = ssub.s32 128, 128
          %1613 = vsyncadd %s1604, %s1612
          %s1614 = smul.addr %s43, 2
          %s1615 = sadd.s32 %s44, %s1614
          %s1616 = smul.addr %s1615, 128
          %s1617 = scalar_lea.hbm %s14, %s1616
          %s1619 = sshll.u32 %s1607, 4
          %s1620 = int_to_ptr.vmem [resolvable:$true] %s1619
          %1622 = dma.vmem_to_hbm [thread:$0]  %s1620, 128, %s1617, %s1604
        $region116: #{tpu_custom_call.1} parent=75 // pred_fallthru
          _
      $region76: #{tpu_custom_call.1} parent=5 // pred_fallthru
        _
      %p1623 = scmp.le.s32.totalorder 2, %s33
      // Predicated region
      $region117: #{tpu_custom_call.1} parent=5 // pred_check
        %p1624 = pneg %p1623
      $region118: #{tpu_custom_call.1} parent=5 // pred_check_branch
        %1626 = sbr.rel (%p1624) target = $region120
      $region119: #{tpu_custom_call.1} parent=5 // pred_region
        %s1627 = ssub.s32 %s33, 2
        // Predicated region
        $region121: #{tpu_custom_call.1} parent=119 // pred_check
          %p1628 = pneg %p405
        $region122: #{tpu_custom_call.1} parent=119 // pred_check_branch
          %1630 = sbr.rel (%p1628) target = $region124
        $region123: #{tpu_custom_call.1} parent=119 // pred_region
          %s1631 = sand.u32 %s390, 1
          %s1632 = scalar_lea.sflag [#allocation8], %s1631
          %s1633 = sand.u32 %s390, 1
          %s1634 = smul.addr %s1633, 8
          %s1635 = scalar_lea.vmem [#allocation18], %s1634
          %1636 = dma.done %s1632, 128
        $region124: #{tpu_custom_call.1} parent=119 // pred_fallthru
          _
      $region120: #{tpu_custom_call.1} parent=5 // pred_fallthru
        _
    $region6: #{tpu_custom_call.1} parent=1 // loop_footer
      %s37 = sadd.s32 1, %s33
    $region7: #{tpu_custom_call.1} parent=1 // loop_footer_branch
      %32 = sbr.rel target = $region3
    $region8: #{tpu_custom_call.1} parent=1 // loop_exit
      _
    %1637 = vsyncpa [#allocation7], 1
    %s1638 = scalar_lea.sflag [#allocation7], 1
    %1639 = vsyncpa %s1638, 1
    %1640 = vsyncpa [#allocation10], 1
    %s1641 = scalar_lea.sflag [#allocation10], 1
    %1642 = vsyncpa %s1641, 1
    %1643 = vsyncpa [#allocation13], 1
    %s1644 = scalar_lea.sflag [#allocation13], 1
    %1645 = vsyncpa %s1644, 1
    %1646 = vsyncpa [#allocation16], 1
    %1647 = vsyncpa [#allocation8], 1
    %s1648 = scalar_lea.sflag [#allocation8], 1
    %1649 = vsyncpa %s1648, 1

</llo_original>
